<compile_context>
chip_gen: v5e
topology: v5e:2x2
jax: 0.10.0
libtpu: 0.0.40
codegen_flags: <defaults>
</compile_context>

<pallas_src>
import jax
import jax.numpy as jnp
from jax.experimental import pallas as pl
from jax.experimental.pallas import tpu as pltpu

# norse-style default parameters
DT = 1e-3
TAU_SYN_INV = 200.0
TAU_MEM_INV = 100.0
V_LEAK = 0.0
V_TH = 1.0
V_RESET = 0.0
TAU_ADAPT_INV = 1.0 / 1200.0
BETA = 1.8

# folded decay constants (valid because V_LEAK == 0 and V_RESET == 0)
ALPHA_MEM = 1.0 - DT * TAU_MEM_INV          # membrane decay
ALPHA_SYN = 1.0 - DT * TAU_SYN_INV          # synaptic-current decay
ALPHA_B = 1.0 - DT * TAU_ADAPT_INV          # adaptive-threshold decay
DT_TMI = DT * TAU_MEM_INV
DT_TAI_VTH = DT * TAU_ADAPT_INV * V_TH
B_JUMP = TAU_ADAPT_INV * BETA


def _pick_block_steps(T, max_k=8):
    """Largest divisor of T not exceeding max_k (timesteps per grid iteration)."""
    for k in range(min(max_k, T), 0, -1):
        if T % k == 0:
            return k
    return 1


def _make_rollout_kernel(h1, h2, batch, k_steps):
    f32 = jnp.float32

    def kernel(cur1_ref, w2t_ref, b2_ref, s1_init_ref, s2_init_ref,
               z2_ref, s1_fin_ref, s2_fin_ref,
               v1_s, i1_s, v2_s, i2_s, badapt_s):
        g = pl.program_id(0)

        # ---- load initial state into VMEM-resident scratch on the first grid step ----
        @pl.when(g == 0)
        def _():
            v1_s[...] = s1_init_ref[:, 0:h1]
            i1_s[...] = s1_init_ref[:, h1:2 * h1]
            v2_s[...] = s2_init_ref[:, 0:h2]
            i2_s[...] = s2_init_ref[:, h2:2 * h2]
            badapt_s[...] = s2_init_ref[:, 2 * h2:3 * h2]

        # resident weights / bias, loaded once per grid step (broadcast hoisted out of K loop)
        w2 = w2t_ref[...]                                      # (h1, h2)
        b2 = jnp.broadcast_to(b2_ref[...], (batch, h2))        # (B, h2)

        z1 = None
        z2 = None
        # statically unrolled inner loop over K timesteps (K is small: <= 8)
        for k in range(k_steps):
            cur1 = cur1_ref[k]                                 # (B, h1) precomputed fc1 output

            # ---- LIF cell ----
            v1 = v1_s[...]
            i1 = i1_s[...]
            v1d = ALPHA_MEM * v1 + DT_TMI * i1
            i1d = ALPHA_SYN * i1
            z1 = jnp.where(v1d - V_TH > 0.0, 1.0, 0.0).astype(f32)
            v1_s[...] = (1.0 - z1) * v1d                       # V_RESET == 0
            i1_s[...] = i1d + cur1

            # ---- fc2 (only matmul left on the serial path) ----
            cur2 = jnp.dot(z1, w2, preferred_element_type=f32) + b2

            # ---- ALIF cell (adaptive threshold) ----
            v2 = v2_s[...]
            i2 = i2_s[...]
            ba = badapt_s[...]
            v2d = ALPHA_MEM * v2 + DT_TMI * i2
            i2d = ALPHA_SYN * i2
            bd = ALPHA_B * ba + DT_TAI_VTH
            z2 = jnp.where(v2d - bd > 0.0, 1.0, 0.0).astype(f32)
            v2_s[...] = (1.0 - z2) * v2d
            i2_s[...] = i2d + cur2
            badapt_s[...] = bd + z2 * B_JUMP

            # spikes are exactly 0/1 -> lossless in bf16; halves HBM writeback bytes
            z2_ref[k] = z2.astype(z2_ref.dtype)

        # ---- write the final packed state once, on the last grid step (slice stores,
        #      no lane-axis concatenate / XLU relayout) ----
        @pl.when(g == pl.num_programs(0) - 1)
        def _():
            s1_fin_ref[:, 0:h1] = z1
            s1_fin_ref[:, h1:2 * h1] = v1_s[...]
            s1_fin_ref[:, 2 * h1:3 * h1] = i1_s[...]
            s2_fin_ref[:, 0:h2] = z2
            s2_fin_ref[:, h2:2 * h2] = v2_s[...]
            s2_fin_ref[:, 2 * h2:3 * h2] = i2_s[...]
            s2_fin_ref[:, 3 * h2:4 * h2] = badapt_s[...]

    return kernel


def snn_controller_rollout(xs, params, state1, state2, block_steps=8):
    """Run the SNN controller for T sequential steps in one fused pallas_call.

    xs: (T, B, input_size) f32.  state1 = (z1, v1, i1).  state2 = (z2, v2, i2, b).
    Returns (outs (T,B,out), z2s (T,B,h2), final_state1, final_state2).
    """
    T, B, input_size = xs.shape
    w1, b1, w2, b2, wr, br = params
    h1 = w1.shape[0]
    h2 = w2.shape[0]
    out_size = wr.shape[0]
    f32 = jnp.float32

    K = _pick_block_steps(T, block_steps)
    n_blocks = T // K

    # ---- hoisted fc1 (no time dependence): one well-shaped matmul in XLA ----
    cur1_all = (xs.reshape(T * B, input_size) @ w1.T + b1).reshape(T, B, h1).astype(f32)

    # host-side layout work: pre-transpose fc2 weights, reshape bias, pack states
    w2t = w2.T                                     # (h1, h2)
    b2r = b2.reshape(1, h2)

    _, v1_0, i1_0 = state1                         # initial z is unused by the dynamics
    _, v2_0, i2_0, b_0 = state2
    s1_init = jnp.concatenate([v1_0, i1_0], axis=-1)            # (B, 2*h1)
    s2_init = jnp.concatenate([v2_0, i2_0, b_0], axis=-1)       # (B, 3*h2)

    kernel = _make_rollout_kernel(h1, h2, B, K)

    const2 = lambda g: (0, 0)     # grid-invariant block -> fetched once, stays in VMEM
    step3 = lambda g: (g, 0, 0)   # per-K-step block

    grid_spec = pltpu.PrefetchScalarGridSpec(
        num_scalar_prefetch=0,
        grid=(n_blocks,),
        in_specs=[
            pl.BlockSpec((K, B, h1), step3),       # cur1 (streamed K steps at a time)
            pl.BlockSpec(w2t.shape, const2),       # w2t (resident)
            pl.BlockSpec(b2r.shape, const2),       # b2  (resident)
            pl.BlockSpec(s1_init.shape, const2),   # packed initial LIF state
            pl.BlockSpec(s2_init.shape, const2),   # packed initial ALIF state
        ],
        out_specs=[
            pl.BlockSpec((K, B, h2), step3),       # z2 spikes, K steps per block, bf16
            pl.BlockSpec((B, 3 * h1), const2),     # final packed LIF state  (z1|v1|i1)
            pl.BlockSpec((B, 4 * h2), const2),     # final packed ALIF state (z2|v2|i2|b)
        ],
        scratch_shapes=[
            pltpu.VMEM((B, h1), f32),   # v1
            pltpu.VMEM((B, h1), f32),   # i1
            pltpu.VMEM((B, h2), f32),   # v2
            pltpu.VMEM((B, h2), f32),   # i2
            pltpu.VMEM((B, h2), f32),   # b (adaptive threshold)
        ],
    )

    out_shape = (
        jax.ShapeDtypeStruct((T, B, h2), jnp.bfloat16),
        jax.ShapeDtypeStruct((B, 3 * h1), f32),
        jax.ShapeDtypeStruct((B, 4 * h2), f32),
    )

    z2s_bf16, s1_fin, s2_fin = pl.pallas_call(
        kernel,
        out_shape=out_shape,
        grid_spec=grid_spec,
        compiler_params=pltpu.CompilerParams(
            dimension_semantics=("arbitrary",)),   # sequential: state carried across steps
    )(cur1_all, w2t, b2r, s1_init, s2_init)

    # ---- hoisted readout + sigmoid: one batched XLA op over all timesteps ----
    z2s = z2s_bf16.astype(f32)                                  # 0/1 spikes: exact
    outs = jax.nn.sigmoid(jnp.einsum('tbh,oh->tbo', z2s, wr) + br)

    state1_new = (s1_fin[:, 0:h1], s1_fin[:, h1:2 * h1], s1_fin[:, 2 * h1:3 * h1])
    state2_new = (s2_fin[:, 0:h2], s2_fin[:, h2:2 * h2],
                  s2_fin[:, 2 * h2:3 * h2], s2_fin[:, 3 * h2:4 * h2])
    return outs, z2s, state1_new, state2_new


def snn_controller_forward(x, params, state1, state2):
    """Single-step forward matching ImprovedSNNController.forward: (out, state1, state2, z2)."""
    outs, z2s, state1_new, state2_new = snn_controller_rollout(
        x[None], params, state1, state2, block_steps=1)
    return outs[0], state1_new, state2_new, z2s[0]


# ----------------------------- pure-JAX reference ------------------------------------
def _reference_step(x, params, state1, state2):
    w1, b1, w2, b2, wr, br = params
    cur1 = x @ w1.T + b1
    _, v1, i1 = state1
    v1d = v1 + DT * TAU_MEM_INV * ((V_LEAK - v1) + i1)
    i1d = i1 + (-DT * TAU_SYN_INV) * i1
    z1 = (v1d - V_TH > 0).astype(jnp.float32)
    v1n = (1 - z1) * v1d + z1 * V_RESET
    i1n = i1d + cur1
    cur2 = z1 @ w2.T + b2
    _, v2, i2, ba = state2
    v2d = v2 + DT * TAU_MEM_INV * ((V_LEAK - v2) + i2)
    i2d = i2 + (-DT * TAU_SYN_INV) * i2
    bd = ba + DT * TAU_ADAPT_INV * (V_TH - ba)
    z2 = (v2d - bd > 0).astype(jnp.float32)
    v2n = (1 - z2) * v2d + z2 * V_RESET
    i2n = i2d + cur2
    bn = bd + z2 * TAU_ADAPT_INV * BETA
    out = jax.nn.sigmoid(z2 @ wr.T + br)
    return out, (z1, v1n, i1n), (z2, v2n, i2n, bn), z2


def _reference_rollout(xs, params, state1, state2):
    def step(carry, x):
        s1, s2 = carry
        out, s1n, s2n, z2 = _reference_step(x, params, s1, s2)
        return (s1n, s2n), (out, z2)

    (s1f, s2f), (outs, z2s) = jax.lax.scan(step, (state1, state2), xs)
    return outs, z2s, s1f, s2f


def init_params(key, input_size, hidden1, hidden2, output_size):
    """Deterministic PyTorch-Linear-style init: U(-1/sqrt(fan_in), 1/sqrt(fan_in))."""
    ks = jax.random.split(key, 6)

    def lin(kw, kb, fan_out, fan_in):
        bound = 1.0 / jnp.sqrt(fan_in)
        w = jax.random.uniform(kw, (fan_out, fan_in), jnp.float32, -bound, bound)
        b = jax.random.uniform(kb, (fan_out,), jnp.float32, -bound, bound)
        return w, b

    w1, b1 = lin(ks[0], ks[1], hidden1, input_size)
    w2, b2 = lin(ks[2], ks[3], hidden2, hidden1)
    wr, br = lin(ks[4], ks[5], output_size, hidden2)
    return (w1, b1, w2, b2, wr, br)


if __name__ == "__main__":
    batch_size = 2
    input_size = 16
    hidden1 = 32
    hidden2 = 32
    output_size = 1
    T = 16   # 2 grid steps of K=8 timesteps -> exercises both inner loop and state carry

    key = jax.random.PRNGKey(0)
    kp, kx = jax.random.split(key)
    params = init_params(kp, input_size, hidden1, hidden2, output_size)
    xs = jax.random.normal(kx, (T, batch_size, input_size), jnp.float32)

    zeros1 = jnp.zeros((batch_size, hidden1), jnp.float32)
    zeros2 = jnp.zeros((batch_size, hidden2), jnp.float32)
    state1 = (zeros1, zeros1, zeros1)          # LIFState(z, v, i)
    state2 = (zeros2, zeros2, zeros2, zeros2)  # ALIFState(z, v, i, b)

    # --- fused T-step rollout (state resident in VMEM across steps) ---
    outs, z2s, s1, s2 = snn_controller_rollout(xs, params, state1, state2)
    jax.block_until_ready(outs)

    ref_outs, ref_z2s, ref_s1, ref_s2 = _reference_rollout(xs, params, state1, state2)
    assert jnp.allclose(outs, ref_outs, atol=1e-4)
    assert jnp.allclose(z2s, ref_z2s, atol=1e-4)
    for a, b in zip(s1, ref_s1):
        assert jnp.allclose(a, b, atol=1e-4)
    for a, b in zip(s2, ref_s2):
        assert jnp.allclose(a, b, atol=1e-4)

    # --- single-step forward matching the PyTorch module signature ---
    out1, s1_1, s2_1, z2_1 = snn_controller_forward(xs[0], params, state1, state2)
    jax.block_until_ready(out1)
    ref_out1, ref_s1_1, ref_s2_1, ref_z2_1 = _reference_step(xs[0], params, state1, state2)
    assert jnp.allclose(out1, ref_out1, atol=1e-5)
    assert jnp.allclose(z2_1, ref_z2_1, atol=1e-5)
    for a, b in zip(s1_1, ref_s1_1):
        assert jnp.allclose(a, b, atol=1e-5)
    for a, b in zip(s2_1, ref_s2_1):
        assert jnp.allclose(a, b, atol=1e-5)

    print("KERNEL_OK")
</pallas_src>

<mosaic_0001>
module attributes {stable_mosaic.version = 11 : i64} {
  func.func @kernel(%arg0: i32, %arg1: memref<8x2x32xf32, #tpu.memory_space<vmem>>, %arg2: memref<32x32xf32, #tpu.memory_space<vmem>>, %arg3: memref<1x32xf32, #tpu.memory_space<vmem>>, %arg4: memref<2x64xf32, #tpu.memory_space<vmem>>, %arg5: memref<2x96xf32, #tpu.memory_space<vmem>>, %arg6: memref<8x2x32xbf16, #tpu.memory_space<vmem>>, %arg7: memref<2x96xf32, #tpu.memory_space<vmem>>, %arg8: memref<2x128xf32, #tpu.memory_space<vmem>>, %arg9: memref<2x32xf32, #tpu.memory_space<vmem>>, %arg10: memref<2x32xf32, #tpu.memory_space<vmem>>, %arg11: memref<2x32xf32, #tpu.memory_space<vmem>>, %arg12: memref<2x32xf32, #tpu.memory_space<vmem>>, %arg13: memref<2x32xf32, #tpu.memory_space<vmem>>) attributes {dimension_semantics = [#tpu.dimension_semantics<arbitrary>], iteration_bounds = array<i64: 2>, scalar_prefetch = 0 : i64, scratch_operands = 5 : i64, tpu.core_type = #tpu.core_type<tc>, window_params = [{transform_indices = @transform_0, window_bounds = array<i64: 8, 2, 32>}, {pipeline_mode = #tpu.pipeline_mode<synchronous>, transform_indices = @transform_1, window_bounds = array<i64: 32, 32>}, {pipeline_mode = #tpu.pipeline_mode<synchronous>, transform_indices = @transform_2, window_bounds = array<i64: 1, 32>}, {pipeline_mode = #tpu.pipeline_mode<synchronous>, transform_indices = @transform_3, window_bounds = array<i64: 2, 64>}, {pipeline_mode = #tpu.pipeline_mode<synchronous>, transform_indices = @transform_4, window_bounds = array<i64: 2, 96>}, {transform_indices = @transform_5, window_bounds = array<i64: 8, 2, 32>}, {pipeline_mode = #tpu.pipeline_mode<synchronous>, transform_indices = @transform_6, window_bounds = array<i64: 2, 96>}, {pipeline_mode = #tpu.pipeline_mode<synchronous>, transform_indices = @transform_7, window_bounds = array<i64: 2, 128>}]} {
    %c0_i32 = arith.constant 0 : i32
    %0 = arith.cmpi eq, %arg0, %c0_i32 : i32
    %1 = arith.extui %0 : i1 to i32
    %c0_i32_0 = arith.constant 0 : i32
    %2 = arith.cmpi ne, %1, %c0_i32_0 : i32
    scf.if %2 {
      %c0_357 = arith.constant 0 : index
      %c0_358 = arith.constant 0 : index
      %490 = vector.load %arg4[%c0_357, %c0_358] : memref<2x64xf32, #tpu.memory_space<vmem>>, vector<2x32xf32>
      %c0_359 = arith.constant 0 : index
      %c0_360 = arith.constant 0 : index
      %491 = vector.load %arg9[%c0_359, %c0_360] : memref<2x32xf32, #tpu.memory_space<vmem>>, vector<2x32xf32>
      tpu.vector_store %arg9[%c0_359, %c0_360], %490 {strides = array<i32>} : memref<2x32xf32, #tpu.memory_space<vmem>>, vector<2x32xf32>,
      %c0_361 = arith.constant 0 : index
      %c32 = arith.constant 32 : index
      %492 = vector.load %arg4[%c0_361, %c32] : memref<2x64xf32, #tpu.memory_space<vmem>>, vector<2x32xf32>
      %c0_362 = arith.constant 0 : index
      %c0_363 = arith.constant 0 : index
      %493 = vector.load %arg10[%c0_362, %c0_363] : memref<2x32xf32, #tpu.memory_space<vmem>>, vector<2x32xf32>
      tpu.vector_store %arg10[%c0_362, %c0_363], %492 {strides = array<i32>} : memref<2x32xf32, #tpu.memory_space<vmem>>, vector<2x32xf32>,
      %c0_364 = arith.constant 0 : index
      %c0_365 = arith.constant 0 : index
      %494 = vector.load %arg5[%c0_364, %c0_365] : memref<2x96xf32, #tpu.memory_space<vmem>>, vector<2x32xf32>
      %c0_366 = arith.constant 0 : index
      %c0_367 = arith.constant 0 : index
      %495 = vector.load %arg11[%c0_366, %c0_367] : memref<2x32xf32, #tpu.memory_space<vmem>>, vector<2x32xf32>
      tpu.vector_store %arg11[%c0_366, %c0_367], %494 {strides = array<i32>} : memref<2x32xf32, #tpu.memory_space<vmem>>, vector<2x32xf32>,
      %c0_368 = arith.constant 0 : index
      %c32_369 = arith.constant 32 : index
      %496 = vector.load %arg5[%c0_368, %c32_369] : memref<2x96xf32, #tpu.memory_space<vmem>>, vector<2x32xf32>
      %c0_370 = arith.constant 0 : index
      %c0_371 = arith.constant 0 : index
      %497 = vector.load %arg12[%c0_370, %c0_371] : memref<2x32xf32, #tpu.memory_space<vmem>>, vector<2x32xf32>
      tpu.vector_store %arg12[%c0_370, %c0_371], %496 {strides = array<i32>} : memref<2x32xf32, #tpu.memory_space<vmem>>, vector<2x32xf32>,
      %c0_372 = arith.constant 0 : index
      %c64 = arith.constant 64 : index
      %498 = vector.load %arg5[%c0_372, %c64] : memref<2x96xf32, #tpu.memory_space<vmem>>, vector<2x32xf32>
      %c0_373 = arith.constant 0 : index
      %c0_374 = arith.constant 0 : index
      %499 = vector.load %arg13[%c0_373, %c0_374] : memref<2x32xf32, #tpu.memory_space<vmem>>, vector<2x32xf32>
      tpu.vector_store %arg13[%c0_373, %c0_374], %498 {strides = array<i32>} : memref<2x32xf32, #tpu.memory_space<vmem>>, vector<2x32xf32>,
    } else {
    }
    %c0 = arith.constant 0 : index
    %c0_1 = arith.constant 0 : index
    %3 = vector.load %arg2[%c0, %c0_1] : memref<32x32xf32, #tpu.memory_space<vmem>>, vector<32x32xf32>
    %c0_2 = arith.constant 0 : index
    %c0_3 = arith.constant 0 : index
    %4 = vector.load %arg3[%c0_2, %c0_3] : memref<1x32xf32, #tpu.memory_space<vmem>>, vector<1x32xf32>
    %5 = vector.shape_cast %4 : vector<1x32xf32> to vector<1x32xf32>
    %6 = vector.broadcast %5 : vector<1x32xf32> to vector<2x32xf32>
    %c0_4 = arith.constant 0 : index
    %c0_5 = arith.constant 0 : index
    %c0_6 = arith.constant 0 : index
    %7 = vector.load %arg1[%c0_4, %c0_5, %c0_6] : memref<8x2x32xf32, #tpu.memory_space<vmem>>, vector<1x2x32xf32>
    %8 = vector.shape_cast %7 : vector<1x2x32xf32> to vector<2x32xf32>
    %c0_7 = arith.constant 0 : index
    %c0_8 = arith.constant 0 : index
    %9 = vector.load %arg9[%c0_7, %c0_8] : memref<2x32xf32, #tpu.memory_space<vmem>>, vector<2x32xf32>
    %c0_9 = arith.constant 0 : index
    %c0_10 = arith.constant 0 : index
    %10 = vector.load %arg10[%c0_9, %c0_10] : memref<2x32xf32, #tpu.memory_space<vmem>>, vector<2x32xf32>
    %cst = arith.constant 0.899999976 : f32
    %11 = vector.broadcast %cst : f32 to vector<2x32xf32>
    %12 = arith.mulf %11, %9 : vector<2x32xf32>
    %cst_11 = arith.constant 1.000000e-01 : f32
    %13 = vector.broadcast %cst_11 : f32 to vector<2x32xf32>
    %14 = arith.mulf %13, %10 : vector<2x32xf32>
    %15 = arith.addf %12, %14 : vector<2x32xf32>
    %cst_12 = arith.constant 8.000000e-01 : f32
    %16 = vector.broadcast %cst_12 : f32 to vector<2x32xf32>
    %17 = arith.mulf %16, %10 : vector<2x32xf32>
    %cst_13 = arith.constant 1.000000e+00 : f32
    %18 = vector.broadcast %cst_13 : f32 to vector<2x32xf32>
    %19 = arith.subf %15, %18 : vector<2x32xf32>
    %cst_14 = arith.constant 0.000000e+00 : f32
    %20 = vector.broadcast %cst_14 : f32 to vector<2x32xf32>
    %21 = arith.cmpf ogt, %19, %20 : vector<2x32xf32>
    %cst_15 = arith.constant 1.000000e+00 : f32
    %cst_16 = arith.constant 0.000000e+00 : f32
    %22 = vector.broadcast %cst_15 : f32 to vector<2x32xf32>
    %23 = vector.broadcast %cst_16 : f32 to vector<2x32xf32>
    %24 = arith.select %21, %22, %23 : vector<2x32xi1>, vector<2x32xf32>
    %cst_17 = arith.constant 1.000000e+00 : f32
    %25 = vector.broadcast %cst_17 : f32 to vector<2x32xf32>
    %26 = arith.subf %25, %24 : vector<2x32xf32>
    %27 = arith.mulf %26, %15 : vector<2x32xf32>
    %c0_18 = arith.constant 0 : index
    %c0_19 = arith.constant 0 : index
    %28 = vector.load %arg9[%c0_18, %c0_19] : memref<2x32xf32, #tpu.memory_space<vmem>>, vector<2x32xf32>
    tpu.vector_store %arg9[%c0_18, %c0_19], %27 {strides = array<i32>} : memref<2x32xf32, #tpu.memory_space<vmem>>, vector<2x32xf32>,
    %29 = arith.addf %17, %8 : vector<2x32xf32>
    %c0_20 = arith.constant 0 : index
    %c0_21 = arith.constant 0 : index
    %30 = vector.load %arg10[%c0_20, %c0_21] : memref<2x32xf32, #tpu.memory_space<vmem>>, vector<2x32xf32>
    tpu.vector_store %arg10[%c0_20, %c0_21], %29 {strides = array<i32>} : memref<2x32xf32, #tpu.memory_space<vmem>>, vector<2x32xf32>,
    %cst_22 = arith.constant dense<0.000000e+00> : vector<2x32xf32>
    %31 = tpu.matmul %24, %3, %cst_22 {dimension_numbers = #tpu.dot_dimension_numbers<[1], [0], [0], [1], [0, 0, 1, 1], [], []>} : vector<2x32xf32>, vector<32x32xf32>, vector<2x32xf32> -> vector<2x32xf32>
    %32 = arith.addf %31, %6 : vector<2x32xf32>
    %c0_23 = arith.constant 0 : index
    %c0_24 = arith.constant 0 : index
    %33 = vector.load %arg11[%c0_23, %c0_24] : memref<2x32xf32, #tpu.memory_space<vmem>>, vector<2x32xf32>
    %c0_25 = arith.constant 0 : index
    %c0_26 = arith.constant 0 : index
    %34 = vector.load %arg12[%c0_25, %c0_26] : memref<2x32xf32, #tpu.memory_space<vmem>>, vector<2x32xf32>
    %c0_27 = arith.constant 0 : index
    %c0_28 = arith.constant 0 : index
    %35 = vector.load %arg13[%c0_27, %c0_28] : memref<2x32xf32, #tpu.memory_space<vmem>>, vector<2x32xf32>
    %cst_29 = arith.constant 0.899999976 : f32
    %36 = vector.broadcast %cst_29 : f32 to vector<2x32xf32>
    %37 = arith.mulf %36, %33 : vector<2x32xf32>
    %cst_30 = arith.constant 1.000000e-01 : f32
    %38 = vector.broadcast %cst_30 : f32 to vector<2x32xf32>
    %39 = arith.mulf %38, %34 : vector<2x32xf32>
    %40 = arith.addf %37, %39 : vector<2x32xf32>
    %cst_31 = arith.constant 8.000000e-01 : f32
    %41 = vector.broadcast %cst_31 : f32 to vector<2x32xf32>
    %42 = arith.mulf %41, %34 : vector<2x32xf32>
    %cst_32 = arith.constant 0.999999165 : f32
    %43 = vector.broadcast %cst_32 : f32 to vector<2x32xf32>
    %44 = arith.mulf %43, %35 : vector<2x32xf32>
    %cst_33 = arith.constant 8.33333331E-7 : f32
    %45 = vector.broadcast %cst_33 : f32 to vector<2x32xf32>
    %46 = arith.addf %44, %45 : vector<2x32xf32>
    %47 = arith.subf %40, %46 : vector<2x32xf32>
    %cst_34 = arith.constant 0.000000e+00 : f32
    %48 = vector.broadcast %cst_34 : f32 to vector<2x32xf32>
    %49 = arith.cmpf ogt, %47, %48 : vector<2x32xf32>
    %cst_35 = arith.constant 1.000000e+00 : f32
    %cst_36 = arith.constant 0.000000e+00 : f32
    %50 = vector.broadcast %cst_35 : f32 to vector<2x32xf32>
    %51 = vector.broadcast %cst_36 : f32 to vector<2x32xf32>
    %52 = arith.select %49, %50, %51 : vector<2x32xi1>, vector<2x32xf32>
    %cst_37 = arith.constant 1.000000e+00 : f32
    %53 = vector.broadcast %cst_37 : f32 to vector<2x32xf32>
    %54 = arith.subf %53, %52 : vector<2x32xf32>
    %55 = arith.mulf %54, %40 : vector<2x32xf32>
    %c0_38 = arith.constant 0 : index
    %c0_39 = arith.constant 0 : index
    %56 = vector.load %arg11[%c0_38, %c0_39] : memref<2x32xf32, #tpu.memory_space<vmem>>, vector<2x32xf32>
    tpu.vector_store %arg11[%c0_38, %c0_39], %55 {strides = array<i32>} : memref<2x32xf32, #tpu.memory_space<vmem>>, vector<2x32xf32>,
    %57 = arith.addf %42, %32 : vector<2x32xf32>
    %c0_40 = arith.constant 0 : index
    %c0_41 = arith.constant 0 : index
    %58 = vector.load %arg12[%c0_40, %c0_41] : memref<2x32xf32, #tpu.memory_space<vmem>>, vector<2x32xf32>
    tpu.vector_store %arg12[%c0_40, %c0_41], %57 {strides = array<i32>} : memref<2x32xf32, #tpu.memory_space<vmem>>, vector<2x32xf32>,
    %cst_42 = arith.constant 1.500000e-03 : f32
    %59 = vector.broadcast %cst_42 : f32 to vector<2x32xf32>
    %60 = arith.mulf %52, %59 : vector<2x32xf32>
    %61 = arith.addf %46, %60 : vector<2x32xf32>
    %c0_43 = arith.constant 0 : index
    %c0_44 = arith.constant 0 : index
    %62 = vector.load %arg13[%c0_43, %c0_44] : memref<2x32xf32, #tpu.memory_space<vmem>>, vector<2x32xf32>
    tpu.vector_store %arg13[%c0_43, %c0_44], %61 {strides = array<i32>} : memref<2x32xf32, #tpu.memory_space<vmem>>, vector<2x32xf32>,
    %63 = arith.truncf %52 : vector<2x32xf32> to vector<2x32xbf16>
    %c0_45 = arith.constant 0 : index
    %c0_46 = arith.constant 0 : index
    %c0_47 = arith.constant 0 : index
    %64 = vector.load %arg6[%c0_45, %c0_46, %c0_47] : memref<8x2x32xbf16, #tpu.memory_space<vmem>>, vector<1x2x32xbf16>
    %65 = vector.shape_cast %64 : vector<1x2x32xbf16> to vector<2x32xbf16>
    %66 = vector.shape_cast %63 : vector<2x32xbf16> to vector<1x2x32xbf16>
    tpu.vector_store %arg6[%c0_45, %c0_46, %c0_47], %66 {strides = array<i32>} : memref<8x2x32xbf16, #tpu.memory_space<vmem>>, vector<1x2x32xbf16>,
    %c1 = arith.constant 1 : index
    %c0_48 = arith.constant 0 : index
    %c0_49 = arith.constant 0 : index
    %67 = vector.load %arg1[%c1, %c0_48, %c0_49] : memref<8x2x32xf32, #tpu.memory_space<vmem>>, vector<1x2x32xf32>
    %68 = vector.shape_cast %67 : vector<1x2x32xf32> to vector<2x32xf32>
    %c0_50 = arith.constant 0 : index
    %c0_51 = arith.constant 0 : index
    %69 = vector.load %arg9[%c0_50, %c0_51] : memref<2x32xf32, #tpu.memory_space<vmem>>, vector<2x32xf32>
    %c0_52 = arith.constant 0 : index
    %c0_53 = arith.constant 0 : index
    %70 = vector.load %arg10[%c0_52, %c0_53] : memref<2x32xf32, #tpu.memory_space<vmem>>, vector<2x32xf32>
    %cst_54 = arith.constant 0.899999976 : f32
    %71 = vector.broadcast %cst_54 : f32 to vector<2x32xf32>
    %72 = arith.mulf %71, %69 : vector<2x32xf32>
    %cst_55 = arith.constant 1.000000e-01 : f32
    %73 = vector.broadcast %cst_55 : f32 to vector<2x32xf32>
    %74 = arith.mulf %73, %70 : vector<2x32xf32>
    %75 = arith.addf %72, %74 : vector<2x32xf32>
    %cst_56 = arith.constant 8.000000e-01 : f32
    %76 = vector.broadcast %cst_56 : f32 to vector<2x32xf32>
    %77 = arith.mulf %76, %70 : vector<2x32xf32>
    %cst_57 = arith.constant 1.000000e+00 : f32
    %78 = vector.broadcast %cst_57 : f32 to vector<2x32xf32>
    %79 = arith.subf %75, %78 : vector<2x32xf32>
    %cst_58 = arith.constant 0.000000e+00 : f32
    %80 = vector.broadcast %cst_58 : f32 to vector<2x32xf32>
    %81 = arith.cmpf ogt, %79, %80 : vector<2x32xf32>
    %cst_59 = arith.constant 1.000000e+00 : f32
    %cst_60 = arith.constant 0.000000e+00 : f32
    %82 = vector.broadcast %cst_59 : f32 to vector<2x32xf32>
    %83 = vector.broadcast %cst_60 : f32 to vector<2x32xf32>
    %84 = arith.select %81, %82, %83 : vector<2x32xi1>, vector<2x32xf32>
    %cst_61 = arith.constant 1.000000e+00 : f32
    %85 = vector.broadcast %cst_61 : f32 to vector<2x32xf32>
    %86 = arith.subf %85, %84 : vector<2x32xf32>
    %87 = arith.mulf %86, %75 : vector<2x32xf32>
    %c0_62 = arith.constant 0 : index
    %c0_63 = arith.constant 0 : index
    %88 = vector.load %arg9[%c0_62, %c0_63] : memref<2x32xf32, #tpu.memory_space<vmem>>, vector<2x32xf32>
    tpu.vector_store %arg9[%c0_62, %c0_63], %87 {strides = array<i32>} : memref<2x32xf32, #tpu.memory_space<vmem>>, vector<2x32xf32>,
    %89 = arith.addf %77, %68 : vector<2x32xf32>
    %c0_64 = arith.constant 0 : index
    %c0_65 = arith.constant 0 : index
    %90 = vector.load %arg10[%c0_64, %c0_65] : memref<2x32xf32, #tpu.memory_space<vmem>>, vector<2x32xf32>
    tpu.vector_store %arg10[%c0_64, %c0_65], %89 {strides = array<i32>} : memref<2x32xf32, #tpu.memory_space<vmem>>, vector<2x32xf32>,
    %cst_66 = arith.constant dense<0.000000e+00> : vector<2x32xf32>
    %91 = tpu.matmul %84, %3, %cst_66 {dimension_numbers = #tpu.dot_dimension_numbers<[1], [0], [0], [1], [0, 0, 1, 1], [], []>} : vector<2x32xf32>, vector<32x32xf32>, vector<2x32xf32> -> vector<2x32xf32>
    %92 = arith.addf %91, %6 : vector<2x32xf32>
    %c0_67 = arith.constant 0 : index
    %c0_68 = arith.constant 0 : index
    %93 = vector.load %arg11[%c0_67, %c0_68] : memref<2x32xf32, #tpu.memory_space<vmem>>, vector<2x32xf32>
    %c0_69 = arith.constant 0 : index
    %c0_70 = arith.constant 0 : index
    %94 = vector.load %arg12[%c0_69, %c0_70] : memref<2x32xf32, #tpu.memory_space<vmem>>, vector<2x32xf32>
    %c0_71 = arith.constant 0 : index
    %c0_72 = arith.constant 0 : index
    %95 = vector.load %arg13[%c0_71, %c0_72] : memref<2x32xf32, #tpu.memory_space<vmem>>, vector<2x32xf32>
    %cst_73 = arith.constant 0.899999976 : f32
    %96 = vector.broadcast %cst_73 : f32 to vector<2x32xf32>
    %97 = arith.mulf %96, %93 : vector<2x32xf32>
    %cst_74 = arith.constant 1.000000e-01 : f32
    %98 = vector.broadcast %cst_74 : f32 to vector<2x32xf32>
    %99 = arith.mulf %98, %94 : vector<2x32xf32>
    %100 = arith.addf %97, %99 : vector<2x32xf32>
    %cst_75 = arith.constant 8.000000e-01 : f32
    %101 = vector.broadcast %cst_75 : f32 to vector<2x32xf32>
    %102 = arith.mulf %101, %94 : vector<2x32xf32>
    %cst_76 = arith.constant 0.999999165 : f32
    %103 = vector.broadcast %cst_76 : f32 to vector<2x32xf32>
    %104 = arith.mulf %103, %95 : vector<2x32xf32>
    %cst_77 = arith.constant 8.33333331E-7 : f32
    %105 = vector.broadcast %cst_77 : f32 to vector<2x32xf32>
    %106 = arith.addf %104, %105 : vector<2x32xf32>
    %107 = arith.subf %100, %106 : vector<2x32xf32>
    %cst_78 = arith.constant 0.000000e+00 : f32
    %108 = vector.broadcast %cst_78 : f32 to vector<2x32xf32>
    %109 = arith.cmpf ogt, %107, %108 : vector<2x32xf32>
    %cst_79 = arith.constant 1.000000e+00 : f32
    %cst_80 = arith.constant 0.000000e+00 : f32
    %110 = vector.broadcast %cst_79 : f32 to vector<2x32xf32>
    %111 = vector.broadcast %cst_80 : f32 to vector<2x32xf32>
    %112 = arith.select %109, %110, %111 : vector<2x32xi1>, vector<2x32xf32>
    %cst_81 = arith.constant 1.000000e+00 : f32
    %113 = vector.broadcast %cst_81 : f32 to vector<2x32xf32>
    %114 = arith.subf %113, %112 : vector<2x32xf32>
    %115 = arith.mulf %114, %100 : vector<2x32xf32>
    %c0_82 = arith.constant 0 : index
    %c0_83 = arith.constant 0 : index
    %116 = vector.load %arg11[%c0_82, %c0_83] : memref<2x32xf32, #tpu.memory_space<vmem>>, vector<2x32xf32>
    tpu.vector_store %arg11[%c0_82, %c0_83], %115 {strides = array<i32>} : memref<2x32xf32, #tpu.memory_space<vmem>>, vector<2x32xf32>,
    %117 = arith.addf %102, %92 : vector<2x32xf32>
    %c0_84 = arith.constant 0 : index
    %c0_85 = arith.constant 0 : index
    %118 = vector.load %arg12[%c0_84, %c0_85] : memref<2x32xf32, #tpu.memory_space<vmem>>, vector<2x32xf32>
    tpu.vector_store %arg12[%c0_84, %c0_85], %117 {strides = array<i32>} : memref<2x32xf32, #tpu.memory_space<vmem>>, vector<2x32xf32>,
    %cst_86 = arith.constant 1.500000e-03 : f32
    %119 = vector.broadcast %cst_86 : f32 to vector<2x32xf32>
    %120 = arith.mulf %112, %119 : vector<2x32xf32>
    %121 = arith.addf %106, %120 : vector<2x32xf32>
    %c0_87 = arith.constant 0 : index
    %c0_88 = arith.constant 0 : index
    %122 = vector.load %arg13[%c0_87, %c0_88] : memref<2x32xf32, #tpu.memory_space<vmem>>, vector<2x32xf32>
    tpu.vector_store %arg13[%c0_87, %c0_88], %121 {strides = array<i32>} : memref<2x32xf32, #tpu.memory_space<vmem>>, vector<2x32xf32>,
    %123 = arith.truncf %112 : vector<2x32xf32> to vector<2x32xbf16>
    %c1_89 = arith.constant 1 : index
    %c0_90 = arith.constant 0 : index
    %c0_91 = arith.constant 0 : index
    %124 = vector.load %arg6[%c1_89, %c0_90, %c0_91] : memref<8x2x32xbf16, #tpu.memory_space<vmem>>, vector<1x2x32xbf16>
    %125 = vector.shape_cast %124 : vector<1x2x32xbf16> to vector<2x32xbf16>
    %126 = vector.shape_cast %123 : vector<2x32xbf16> to vector<1x2x32xbf16>
    tpu.vector_store %arg6[%c1_89, %c0_90, %c0_91], %126 {strides = array<i32>} : memref<8x2x32xbf16, #tpu.memory_space<vmem>>, vector<1x2x32xbf16>,
    %c2 = arith.constant 2 : index
    %c0_92 = arith.constant 0 : index
    %c0_93 = arith.constant 0 : index
    %127 = vector.load %arg1[%c2, %c0_92, %c0_93] : memref<8x2x32xf32, #tpu.memory_space<vmem>>, vector<1x2x32xf32>
    %128 = vector.shape_cast %127 : vector<1x2x32xf32> to vector<2x32xf32>
    %c0_94 = arith.constant 0 : index
    %c0_95 = arith.constant 0 : index
    %129 = vector.load %arg9[%c0_94, %c0_95] : memref<2x32xf32, #tpu.memory_space<vmem>>, vector<2x32xf32>
    %c0_96 = arith.constant 0 : index
    %c0_97 = arith.constant 0 : index
    %130 = vector.load %arg10[%c0_96, %c0_97] : memref<2x32xf32, #tpu.memory_space<vmem>>, vector<2x32xf32>
    %cst_98 = arith.constant 0.899999976 : f32
    %131 = vector.broadcast %cst_98 : f32 to vector<2x32xf32>
    %132 = arith.mulf %131, %129 : vector<2x32xf32>
    %cst_99 = arith.constant 1.000000e-01 : f32
    %133 = vector.broadcast %cst_99 : f32 to vector<2x32xf32>
    %134 = arith.mulf %133, %130 : vector<2x32xf32>
    %135 = arith.addf %132, %134 : vector<2x32xf32>
    %cst_100 = arith.constant 8.000000e-01 : f32
    %136 = vector.broadcast %cst_100 : f32 to vector<2x32xf32>
    %137 = arith.mulf %136, %130 : vector<2x32xf32>
    %cst_101 = arith.constant 1.000000e+00 : f32
    %138 = vector.broadcast %cst_101 : f32 to vector<2x32xf32>
    %139 = arith.subf %135, %138 : vector<2x32xf32>
    %cst_102 = arith.constant 0.000000e+00 : f32
    %140 = vector.broadcast %cst_102 : f32 to vector<2x32xf32>
    %141 = arith.cmpf ogt, %139, %140 : vector<2x32xf32>
    %cst_103 = arith.constant 1.000000e+00 : f32
    %cst_104 = arith.constant 0.000000e+00 : f32
    %142 = vector.broadcast %cst_103 : f32 to vector<2x32xf32>
    %143 = vector.broadcast %cst_104 : f32 to vector<2x32xf32>
    %144 = arith.select %141, %142, %143 : vector<2x32xi1>, vector<2x32xf32>
    %cst_105 = arith.constant 1.000000e+00 : f32
    %145 = vector.broadcast %cst_105 : f32 to vector<2x32xf32>
    %146 = arith.subf %145, %144 : vector<2x32xf32>
    %147 = arith.mulf %146, %135 : vector<2x32xf32>
    %c0_106 = arith.constant 0 : index
    %c0_107 = arith.constant 0 : index
    %148 = vector.load %arg9[%c0_106, %c0_107] : memref<2x32xf32, #tpu.memory_space<vmem>>, vector<2x32xf32>
    tpu.vector_store %arg9[%c0_106, %c0_107], %147 {strides = array<i32>} : memref<2x32xf32, #tpu.memory_space<vmem>>, vector<2x32xf32>,
    %149 = arith.addf %137, %128 : vector<2x32xf32>
    %c0_108 = arith.constant 0 : index
    %c0_109 = arith.constant 0 : index
    %150 = vector.load %arg10[%c0_108, %c0_109] : memref<2x32xf32, #tpu.memory_space<vmem>>, vector<2x32xf32>
    tpu.vector_store %arg10[%c0_108, %c0_109], %149 {strides = array<i32>} : memref<2x32xf32, #tpu.memory_space<vmem>>, vector<2x32xf32>,
    %cst_110 = arith.constant dense<0.000000e+00> : vector<2x32xf32>
    %151 = tpu.matmul %144, %3, %cst_110 {dimension_numbers = #tpu.dot_dimension_numbers<[1], [0], [0], [1], [0, 0, 1, 1], [], []>} : vector<2x32xf32>, vector<32x32xf32>, vector<2x32xf32> -> vector<2x32xf32>
    %152 = arith.addf %151, %6 : vector<2x32xf32>
    %c0_111 = arith.constant 0 : index
    %c0_112 = arith.constant 0 : index
    %153 = vector.load %arg11[%c0_111, %c0_112] : memref<2x32xf32, #tpu.memory_space<vmem>>, vector<2x32xf32>
    %c0_113 = arith.constant 0 : index
    %c0_114 = arith.constant 0 : index
    %154 = vector.load %arg12[%c0_113, %c0_114] : memref<2x32xf32, #tpu.memory_space<vmem>>, vector<2x32xf32>
    %c0_115 = arith.constant 0 : index
    %c0_116 = arith.constant 0 : index
    %155 = vector.load %arg13[%c0_115, %c0_116] : memref<2x32xf32, #tpu.memory_space<vmem>>, vector<2x32xf32>
    %cst_117 = arith.constant 0.899999976 : f32
    %156 = vector.broadcast %cst_117 : f32 to vector<2x32xf32>
    %157 = arith.mulf %156, %153 : vector<2x32xf32>
    %cst_118 = arith.constant 1.000000e-01 : f32
    %158 = vector.broadcast %cst_118 : f32 to vector<2x32xf32>
    %159 = arith.mulf %158, %154 : vector<2x32xf32>
    %160 = arith.addf %157, %159 : vector<2x32xf32>
    %cst_119 = arith.constant 8.000000e-01 : f32
    %161 = vector.broadcast %cst_119 : f32 to vector<2x32xf32>
    %162 = arith.mulf %161, %154 : vector<2x32xf32>
    %cst_120 = arith.constant 0.999999165 : f32
    %163 = vector.broadcast %cst_120 : f32 to vector<2x32xf32>
    %164 = arith.mulf %163, %155 : vector<2x32xf32>
    %cst_121 = arith.constant 8.33333331E-7 : f32
    %165 = vector.broadcast %cst_121 : f32 to vector<2x32xf32>
    %166 = arith.addf %164, %165 : vector<2x32xf32>
    %167 = arith.subf %160, %166 : vector<2x32xf32>
    %cst_122 = arith.constant 0.000000e+00 : f32
    %168 = vector.broadcast %cst_122 : f32 to vector<2x32xf32>
    %169 = arith.cmpf ogt, %167, %168 : vector<2x32xf32>
    %cst_123 = arith.constant 1.000000e+00 : f32
    %cst_124 = arith.constant 0.000000e+00 : f32
    %170 = vector.broadcast %cst_123 : f32 to vector<2x32xf32>
    %171 = vector.broadcast %cst_124 : f32 to vector<2x32xf32>
    %172 = arith.select %169, %170, %171 : vector<2x32xi1>, vector<2x32xf32>
    %cst_125 = arith.constant 1.000000e+00 : f32
    %173 = vector.broadcast %cst_125 : f32 to vector<2x32xf32>
    %174 = arith.subf %173, %172 : vector<2x32xf32>
    %175 = arith.mulf %174, %160 : vector<2x32xf32>
    %c0_126 = arith.constant 0 : index
    %c0_127 = arith.constant 0 : index
    %176 = vector.load %arg11[%c0_126, %c0_127] : memref<2x32xf32, #tpu.memory_space<vmem>>, vector<2x32xf32>
    tpu.vector_store %arg11[%c0_126, %c0_127], %175 {strides = array<i32>} : memref<2x32xf32, #tpu.memory_space<vmem>>, vector<2x32xf32>,
    %177 = arith.addf %162, %152 : vector<2x32xf32>
    %c0_128 = arith.constant 0 : index
    %c0_129 = arith.constant 0 : index
    %178 = vector.load %arg12[%c0_128, %c0_129] : memref<2x32xf32, #tpu.memory_space<vmem>>, vector<2x32xf32>
    tpu.vector_store %arg12[%c0_128, %c0_129], %177 {strides = array<i32>} : memref<2x32xf32, #tpu.memory_space<vmem>>, vector<2x32xf32>,
    %cst_130 = arith.constant 1.500000e-03 : f32
    %179 = vector.broadcast %cst_130 : f32 to vector<2x32xf32>
    %180 = arith.mulf %172, %179 : vector<2x32xf32>
    %181 = arith.addf %166, %180 : vector<2x32xf32>
    %c0_131 = arith.constant 0 : index
    %c0_132 = arith.constant 0 : index
    %182 = vector.load %arg13[%c0_131, %c0_132] : memref<2x32xf32, #tpu.memory_space<vmem>>, vector<2x32xf32>
    tpu.vector_store %arg13[%c0_131, %c0_132], %181 {strides = array<i32>} : memref<2x32xf32, #tpu.memory_space<vmem>>, vector<2x32xf32>,
    %183 = arith.truncf %172 : vector<2x32xf32> to vector<2x32xbf16>
    %c2_133 = arith.constant 2 : index
    %c0_134 = arith.constant 0 : index
    %c0_135 = arith.constant 0 : index
    %184 = vector.load %arg6[%c2_133, %c0_134, %c0_135] : memref<8x2x32xbf16, #tpu.memory_space<vmem>>, vector<1x2x32xbf16>
    %185 = vector.shape_cast %184 : vector<1x2x32xbf16> to vector<2x32xbf16>
    %186 = vector.shape_cast %183 : vector<2x32xbf16> to vector<1x2x32xbf16>
    tpu.vector_store %arg6[%c2_133, %c0_134, %c0_135], %186 {strides = array<i32>} : memref<8x2x32xbf16, #tpu.memory_space<vmem>>, vector<1x2x32xbf16>,
    %c3 = arith.constant 3 : index
    %c0_136 = arith.constant 0 : index
    %c0_137 = arith.constant 0 : index
    %187 = vector.load %arg1[%c3, %c0_136, %c0_137] : memref<8x2x32xf32, #tpu.memory_space<vmem>>, vector<1x2x32xf32>
    %188 = vector.shape_cast %187 : vector<1x2x32xf32> to vector<2x32xf32>
    %c0_138 = arith.constant 0 : index
    %c0_139 = arith.constant 0 : index
    %189 = vector.load %arg9[%c0_138, %c0_139] : memref<2x32xf32, #tpu.memory_space<vmem>>, vector<2x32xf32>
    %c0_140 = arith.constant 0 : index
    %c0_141 = arith.constant 0 : index
    %190 = vector.load %arg10[%c0_140, %c0_141] : memref<2x32xf32, #tpu.memory_space<vmem>>, vector<2x32xf32>
    %cst_142 = arith.constant 0.899999976 : f32
    %191 = vector.broadcast %cst_142 : f32 to vector<2x32xf32>
    %192 = arith.mulf %191, %189 : vector<2x32xf32>
    %cst_143 = arith.constant 1.000000e-01 : f32
    %193 = vector.broadcast %cst_143 : f32 to vector<2x32xf32>
    %194 = arith.mulf %193, %190 : vector<2x32xf32>
    %195 = arith.addf %192, %194 : vector<2x32xf32>
    %cst_144 = arith.constant 8.000000e-01 : f32
    %196 = vector.broadcast %cst_144 : f32 to vector<2x32xf32>
    %197 = arith.mulf %196, %190 : vector<2x32xf32>
    %cst_145 = arith.constant 1.000000e+00 : f32
    %198 = vector.broadcast %cst_145 : f32 to vector<2x32xf32>
    %199 = arith.subf %195, %198 : vector<2x32xf32>
    %cst_146 = arith.constant 0.000000e+00 : f32
    %200 = vector.broadcast %cst_146 : f32 to vector<2x32xf32>
    %201 = arith.cmpf ogt, %199, %200 : vector<2x32xf32>
    %cst_147 = arith.constant 1.000000e+00 : f32
    %cst_148 = arith.constant 0.000000e+00 : f32
    %202 = vector.broadcast %cst_147 : f32 to vector<2x32xf32>
    %203 = vector.broadcast %cst_148 : f32 to vector<2x32xf32>
    %204 = arith.select %201, %202, %203 : vector<2x32xi1>, vector<2x32xf32>
    %cst_149 = arith.constant 1.000000e+00 : f32
    %205 = vector.broadcast %cst_149 : f32 to vector<2x32xf32>
    %206 = arith.subf %205, %204 : vector<2x32xf32>
    %207 = arith.mulf %206, %195 : vector<2x32xf32>
    %c0_150 = arith.constant 0 : index
    %c0_151 = arith.constant 0 : index
    %208 = vector.load %arg9[%c0_150, %c0_151] : memref<2x32xf32, #tpu.memory_space<vmem>>, vector<2x32xf32>
    tpu.vector_store %arg9[%c0_150, %c0_151], %207 {strides = array<i32>} : memref<2x32xf32, #tpu.memory_space<vmem>>, vector<2x32xf32>,
    %209 = arith.addf %197, %188 : vector<2x32xf32>
    %c0_152 = arith.constant 0 : index
    %c0_153 = arith.constant 0 : index
    %210 = vector.load %arg10[%c0_152, %c0_153] : memref<2x32xf32, #tpu.memory_space<vmem>>, vector<2x32xf32>
    tpu.vector_store %arg10[%c0_152, %c0_153], %209 {strides = array<i32>} : memref<2x32xf32, #tpu.memory_space<vmem>>, vector<2x32xf32>,
    %cst_154 = arith.constant dense<0.000000e+00> : vector<2x32xf32>
    %211 = tpu.matmul %204, %3, %cst_154 {dimension_numbers = #tpu.dot_dimension_numbers<[1], [0], [0], [1], [0, 0, 1, 1], [], []>} : vector<2x32xf32>, vector<32x32xf32>, vector<2x32xf32> -> vector<2x32xf32>
    %212 = arith.addf %211, %6 : vector<2x32xf32>
    %c0_155 = arith.constant 0 : index
    %c0_156 = arith.constant 0 : index
    %213 = vector.load %arg11[%c0_155, %c0_156] : memref<2x32xf32, #tpu.memory_space<vmem>>, vector<2x32xf32>
    %c0_157 = arith.constant 0 : index
    %c0_158 = arith.constant 0 : index
    %214 = vector.load %arg12[%c0_157, %c0_158] : memref<2x32xf32, #tpu.memory_space<vmem>>, vector<2x32xf32>
    %c0_159 = arith.constant 0 : index
    %c0_160 = arith.constant 0 : index
    %215 = vector.load %arg13[%c0_159, %c0_160] : memref<2x32xf32, #tpu.memory_space<vmem>>, vector<2x32xf32>
    %cst_161 = arith.constant 0.899999976 : f32
    %216 = vector.broadcast %cst_161 : f32 to vector<2x32xf32>
    %217 = arith.mulf %216, %213 : vector<2x32xf32>
    %cst_162 = arith.constant 1.000000e-01 : f32
    %218 = vector.broadcast %cst_162 : f32 to vector<2x32xf32>
    %219 = arith.mulf %218, %214 : vector<2x32xf32>
    %220 = arith.addf %217, %219 : vector<2x32xf32>
    %cst_163 = arith.constant 8.000000e-01 : f32
    %221 = vector.broadcast %cst_163 : f32 to vector<2x32xf32>
    %222 = arith.mulf %221, %214 : vector<2x32xf32>
    %cst_164 = arith.constant 0.999999165 : f32
    %223 = vector.broadcast %cst_164 : f32 to vector<2x32xf32>
    %224 = arith.mulf %223, %215 : vector<2x32xf32>
    %cst_165 = arith.constant 8.33333331E-7 : f32
    %225 = vector.broadcast %cst_165 : f32 to vector<2x32xf32>
    %226 = arith.addf %224, %225 : vector<2x32xf32>
    %227 = arith.subf %220, %226 : vector<2x32xf32>
    %cst_166 = arith.constant 0.000000e+00 : f32
    %228 = vector.broadcast %cst_166 : f32 to vector<2x32xf32>
    %229 = arith.cmpf ogt, %227, %228 : vector<2x32xf32>
    %cst_167 = arith.constant 1.000000e+00 : f32
    %cst_168 = arith.constant 0.000000e+00 : f32
    %230 = vector.broadcast %cst_167 : f32 to vector<2x32xf32>
    %231 = vector.broadcast %cst_168 : f32 to vector<2x32xf32>
    %232 = arith.select %229, %230, %231 : vector<2x32xi1>, vector<2x32xf32>
    %cst_169 = arith.constant 1.000000e+00 : f32
    %233 = vector.broadcast %cst_169 : f32 to vector<2x32xf32>
    %234 = arith.subf %233, %232 : vector<2x32xf32>
    %235 = arith.mulf %234, %220 : vector<2x32xf32>
    %c0_170 = arith.constant 0 : index
    %c0_171 = arith.constant 0 : index
    %236 = vector.load %arg11[%c0_170, %c0_171] : memref<2x32xf32, #tpu.memory_space<vmem>>, vector<2x32xf32>
    tpu.vector_store %arg11[%c0_170, %c0_171], %235 {strides = array<i32>} : memref<2x32xf32, #tpu.memory_space<vmem>>, vector<2x32xf32>,
    %237 = arith.addf %222, %212 : vector<2x32xf32>
    %c0_172 = arith.constant 0 : index
    %c0_173 = arith.constant 0 : index
    %238 = vector.load %arg12[%c0_172, %c0_173] : memref<2x32xf32, #tpu.memory_space<vmem>>, vector<2x32xf32>
    tpu.vector_store %arg12[%c0_172, %c0_173], %237 {strides = array<i32>} : memref<2x32xf32, #tpu.memory_space<vmem>>, vector<2x32xf32>,
    %cst_174 = arith.constant 1.500000e-03 : f32
    %239 = vector.broadcast %cst_174 : f32 to vector<2x32xf32>
    %240 = arith.mulf %232, %239 : vector<2x32xf32>
    %241 = arith.addf %226, %240 : vector<2x32xf32>
    %c0_175 = arith.constant 0 : index
    %c0_176 = arith.constant 0 : index
    %242 = vector.load %arg13[%c0_175, %c0_176] : memref<2x32xf32, #tpu.memory_space<vmem>>, vector<2x32xf32>
    tpu.vector_store %arg13[%c0_175, %c0_176], %241 {strides = array<i32>} : memref<2x32xf32, #tpu.memory_space<vmem>>, vector<2x32xf32>,
    %243 = arith.truncf %232 : vector<2x32xf32> to vector<2x32xbf16>
    %c3_177 = arith.constant 3 : index
    %c0_178 = arith.constant 0 : index
    %c0_179 = arith.constant 0 : index
    %244 = vector.load %arg6[%c3_177, %c0_178, %c0_179] : memref<8x2x32xbf16, #tpu.memory_space<vmem>>, vector<1x2x32xbf16>
    %245 = vector.shape_cast %244 : vector<1x2x32xbf16> to vector<2x32xbf16>
    %246 = vector.shape_cast %243 : vector<2x32xbf16> to vector<1x2x32xbf16>
    tpu.vector_store %arg6[%c3_177, %c0_178, %c0_179], %246 {strides = array<i32>} : memref<8x2x32xbf16, #tpu.memory_space<vmem>>, vector<1x2x32xbf16>,
    %c4 = arith.constant 4 : index
    %c0_180 = arith.constant 0 : index
    %c0_181 = arith.constant 0 : index
    %247 = vector.load %arg1[%c4, %c0_180, %c0_181] : memref<8x2x32xf32, #tpu.memory_space<vmem>>, vector<1x2x32xf32>
    %248 = vector.shape_cast %247 : vector<1x2x32xf32> to vector<2x32xf32>
    %c0_182 = arith.constant 0 : index
    %c0_183 = arith.constant 0 : index
    %249 = vector.load %arg9[%c0_182, %c0_183] : memref<2x32xf32, #tpu.memory_space<vmem>>, vector<2x32xf32>
    %c0_184 = arith.constant 0 : index
    %c0_185 = arith.constant 0 : index
    %250 = vector.load %arg10[%c0_184, %c0_185] : memref<2x32xf32, #tpu.memory_space<vmem>>, vector<2x32xf32>
    %cst_186 = arith.constant 0.899999976 : f32
    %251 = vector.broadcast %cst_186 : f32 to vector<2x32xf32>
    %252 = arith.mulf %251, %249 : vector<2x32xf32>
    %cst_187 = arith.constant 1.000000e-01 : f32
    %253 = vector.broadcast %cst_187 : f32 to vector<2x32xf32>
    %254 = arith.mulf %253, %250 : vector<2x32xf32>
    %255 = arith.addf %252, %254 : vector<2x32xf32>
    %cst_188 = arith.constant 8.000000e-01 : f32
    %256 = vector.broadcast %cst_188 : f32 to vector<2x32xf32>
    %257 = arith.mulf %256, %250 : vector<2x32xf32>
    %cst_189 = arith.constant 1.000000e+00 : f32
    %258 = vector.broadcast %cst_189 : f32 to vector<2x32xf32>
    %259 = arith.subf %255, %258 : vector<2x32xf32>
    %cst_190 = arith.constant 0.000000e+00 : f32
    %260 = vector.broadcast %cst_190 : f32 to vector<2x32xf32>
    %261 = arith.cmpf ogt, %259, %260 : vector<2x32xf32>
    %cst_191 = arith.constant 1.000000e+00 : f32
    %cst_192 = arith.constant 0.000000e+00 : f32
    %262 = vector.broadcast %cst_191 : f32 to vector<2x32xf32>
    %263 = vector.broadcast %cst_192 : f32 to vector<2x32xf32>
    %264 = arith.select %261, %262, %263 : vector<2x32xi1>, vector<2x32xf32>
    %cst_193 = arith.constant 1.000000e+00 : f32
    %265 = vector.broadcast %cst_193 : f32 to vector<2x32xf32>
    %266 = arith.subf %265, %264 : vector<2x32xf32>
    %267 = arith.mulf %266, %255 : vector<2x32xf32>
    %c0_194 = arith.constant 0 : index
    %c0_195 = arith.constant 0 : index
    %268 = vector.load %arg9[%c0_194, %c0_195] : memref<2x32xf32, #tpu.memory_space<vmem>>, vector<2x32xf32>
    tpu.vector_store %arg9[%c0_194, %c0_195], %267 {strides = array<i32>} : memref<2x32xf32, #tpu.memory_space<vmem>>, vector<2x32xf32>,
    %269 = arith.addf %257, %248 : vector<2x32xf32>
    %c0_196 = arith.constant 0 : index
    %c0_197 = arith.constant 0 : index
    %270 = vector.load %arg10[%c0_196, %c0_197] : memref<2x32xf32, #tpu.memory_space<vmem>>, vector<2x32xf32>
    tpu.vector_store %arg10[%c0_196, %c0_197], %269 {strides = array<i32>} : memref<2x32xf32, #tpu.memory_space<vmem>>, vector<2x32xf32>,
    %cst_198 = arith.constant dense<0.000000e+00> : vector<2x32xf32>
    %271 = tpu.matmul %264, %3, %cst_198 {dimension_numbers = #tpu.dot_dimension_numbers<[1], [0], [0], [1], [0, 0, 1, 1], [], []>} : vector<2x32xf32>, vector<32x32xf32>, vector<2x32xf32> -> vector<2x32xf32>
    %272 = arith.addf %271, %6 : vector<2x32xf32>
    %c0_199 = arith.constant 0 : index
    %c0_200 = arith.constant 0 : index
    %273 = vector.load %arg11[%c0_199, %c0_200] : memref<2x32xf32, #tpu.memory_space<vmem>>, vector<2x32xf32>
    %c0_201 = arith.constant 0 : index
    %c0_202 = arith.constant 0 : index
    %274 = vector.load %arg12[%c0_201, %c0_202] : memref<2x32xf32, #tpu.memory_space<vmem>>, vector<2x32xf32>
    %c0_203 = arith.constant 0 : index
    %c0_204 = arith.constant 0 : index
    %275 = vector.load %arg13[%c0_203, %c0_204] : memref<2x32xf32, #tpu.memory_space<vmem>>, vector<2x32xf32>
    %cst_205 = arith.constant 0.899999976 : f32
    %276 = vector.broadcast %cst_205 : f32 to vector<2x32xf32>
    %277 = arith.mulf %276, %273 : vector<2x32xf32>
    %cst_206 = arith.constant 1.000000e-01 : f32
    %278 = vector.broadcast %cst_206 : f32 to vector<2x32xf32>
    %279 = arith.mulf %278, %274 : vector<2x32xf32>
    %280 = arith.addf %277, %279 : vector<2x32xf32>
    %cst_207 = arith.constant 8.000000e-01 : f32
    %281 = vector.broadcast %cst_207 : f32 to vector<2x32xf32>
    %282 = arith.mulf %281, %274 : vector<2x32xf32>
    %cst_208 = arith.constant 0.999999165 : f32
    %283 = vector.broadcast %cst_208 : f32 to vector<2x32xf32>
    %284 = arith.mulf %283, %275 : vector<2x32xf32>
    %cst_209 = arith.constant 8.33333331E-7 : f32
    %285 = vector.broadcast %cst_209 : f32 to vector<2x32xf32>
    %286 = arith.addf %284, %285 : vector<2x32xf32>
    %287 = arith.subf %280, %286 : vector<2x32xf32>
    %cst_210 = arith.constant 0.000000e+00 : f32
    %288 = vector.broadcast %cst_210 : f32 to vector<2x32xf32>
    %289 = arith.cmpf ogt, %287, %288 : vector<2x32xf32>
    %cst_211 = arith.constant 1.000000e+00 : f32
    %cst_212 = arith.constant 0.000000e+00 : f32
    %290 = vector.broadcast %cst_211 : f32 to vector<2x32xf32>
    %291 = vector.broadcast %cst_212 : f32 to vector<2x32xf32>
    %292 = arith.select %289, %290, %291 : vector<2x32xi1>, vector<2x32xf32>
    %cst_213 = arith.constant 1.000000e+00 : f32
    %293 = vector.broadcast %cst_213 : f32 to vector<2x32xf32>
    %294 = arith.subf %293, %292 : vector<2x32xf32>
    %295 = arith.mulf %294, %280 : vector<2x32xf32>
    %c0_214 = arith.constant 0 : index
    %c0_215 = arith.constant 0 : index
    %296 = vector.load %arg11[%c0_214, %c0_215] : memref<2x32xf32, #tpu.memory_space<vmem>>, vector<2x32xf32>
    tpu.vector_store %arg11[%c0_214, %c0_215], %295 {strides = array<i32>} : memref<2x32xf32, #tpu.memory_space<vmem>>, vector<2x32xf32>,
    %297 = arith.addf %282, %272 : vector<2x32xf32>
    %c0_216 = arith.constant 0 : index
    %c0_217 = arith.constant 0 : index
    %298 = vector.load %arg12[%c0_216, %c0_217] : memref<2x32xf32, #tpu.memory_space<vmem>>, vector<2x32xf32>
    tpu.vector_store %arg12[%c0_216, %c0_217], %297 {strides = array<i32>} : memref<2x32xf32, #tpu.memory_space<vmem>>, vector<2x32xf32>,
    %cst_218 = arith.constant 1.500000e-03 : f32
    %299 = vector.broadcast %cst_218 : f32 to vector<2x32xf32>
    %300 = arith.mulf %292, %299 : vector<2x32xf32>
    %301 = arith.addf %286, %300 : vector<2x32xf32>
    %c0_219 = arith.constant 0 : index
    %c0_220 = arith.constant 0 : index
    %302 = vector.load %arg13[%c0_219, %c0_220] : memref<2x32xf32, #tpu.memory_space<vmem>>, vector<2x32xf32>
    tpu.vector_store %arg13[%c0_219, %c0_220], %301 {strides = array<i32>} : memref<2x32xf32, #tpu.memory_space<vmem>>, vector<2x32xf32>,
    %303 = arith.truncf %292 : vector<2x32xf32> to vector<2x32xbf16>
    %c4_221 = arith.constant 4 : index
    %c0_222 = arith.constant 0 : index
    %c0_223 = arith.constant 0 : index
    %304 = vector.load %arg6[%c4_221, %c0_222, %c0_223] : memref<8x2x32xbf16, #tpu.memory_space<vmem>>, vector<1x2x32xbf16>
    %305 = vector.shape_cast %304 : vector<1x2x32xbf16> to vector<2x32xbf16>
    %306 = vector.shape_cast %303 : vector<2x32xbf16> to vector<1x2x32xbf16>
    tpu.vector_store %arg6[%c4_221, %c0_222, %c0_223], %306 {strides = array<i32>} : memref<8x2x32xbf16, #tpu.memory_space<vmem>>, vector<1x2x32xbf16>,
    %c5 = arith.constant 5 : index
    %c0_224 = arith.constant 0 : index
    %c0_225 = arith.constant 0 : index
    %307 = vector.load %arg1[%c5, %c0_224, %c0_225] : memref<8x2x32xf32, #tpu.memory_space<vmem>>, vector<1x2x32xf32>
    %308 = vector.shape_cast %307 : vector<1x2x32xf32> to vector<2x32xf32>
    %c0_226 = arith.constant 0 : index
    %c0_227 = arith.constant 0 : index
    %309 = vector.load %arg9[%c0_226, %c0_227] : memref<2x32xf32, #tpu.memory_space<vmem>>, vector<2x32xf32>
    %c0_228 = arith.constant 0 : index
    %c0_229 = arith.constant 0 : index
    %310 = vector.load %arg10[%c0_228, %c0_229] : memref<2x32xf32, #tpu.memory_space<vmem>>, vector<2x32xf32>
    %cst_230 = arith.constant 0.899999976 : f32
    %311 = vector.broadcast %cst_230 : f32 to vector<2x32xf32>
    %312 = arith.mulf %311, %309 : vector<2x32xf32>
    %cst_231 = arith.constant 1.000000e-01 : f32
    %313 = vector.broadcast %cst_231 : f32 to vector<2x32xf32>
    %314 = arith.mulf %313, %310 : vector<2x32xf32>
    %315 = arith.addf %312, %314 : vector<2x32xf32>
    %cst_232 = arith.constant 8.000000e-01 : f32
    %316 = vector.broadcast %cst_232 : f32 to vector<2x32xf32>
    %317 = arith.mulf %316, %310 : vector<2x32xf32>
    %cst_233 = arith.constant 1.000000e+00 : f32
    %318 = vector.broadcast %cst_233 : f32 to vector<2x32xf32>
    %319 = arith.subf %315, %318 : vector<2x32xf32>
    %cst_234 = arith.constant 0.000000e+00 : f32
    %320 = vector.broadcast %cst_234 : f32 to vector<2x32xf32>
    %321 = arith.cmpf ogt, %319, %320 : vector<2x32xf32>
    %cst_235 = arith.constant 1.000000e+00 : f32
    %cst_236 = arith.constant 0.000000e+00 : f32
    %322 = vector.broadcast %cst_235 : f32 to vector<2x32xf32>
    %323 = vector.broadcast %cst_236 : f32 to vector<2x32xf32>
    %324 = arith.select %321, %322, %323 : vector<2x32xi1>, vector<2x32xf32>
    %cst_237 = arith.constant 1.000000e+00 : f32
    %325 = vector.broadcast %cst_237 : f32 to vector<2x32xf32>
    %326 = arith.subf %325, %324 : vector<2x32xf32>
    %327 = arith.mulf %326, %315 : vector<2x32xf32>
    %c0_238 = arith.constant 0 : index
    %c0_239 = arith.constant 0 : index
    %328 = vector.load %arg9[%c0_238, %c0_239] : memref<2x32xf32, #tpu.memory_space<vmem>>, vector<2x32xf32>
    tpu.vector_store %arg9[%c0_238, %c0_239], %327 {strides = array<i32>} : memref<2x32xf32, #tpu.memory_space<vmem>>, vector<2x32xf32>,
    %329 = arith.addf %317, %308 : vector<2x32xf32>
    %c0_240 = arith.constant 0 : index
    %c0_241 = arith.constant 0 : index
    %330 = vector.load %arg10[%c0_240, %c0_241] : memref<2x32xf32, #tpu.memory_space<vmem>>, vector<2x32xf32>
    tpu.vector_store %arg10[%c0_240, %c0_241], %329 {strides = array<i32>} : memref<2x32xf32, #tpu.memory_space<vmem>>, vector<2x32xf32>,
    %cst_242 = arith.constant dense<0.000000e+00> : vector<2x32xf32>
    %331 = tpu.matmul %324, %3, %cst_242 {dimension_numbers = #tpu.dot_dimension_numbers<[1], [0], [0], [1], [0, 0, 1, 1], [], []>} : vector<2x32xf32>, vector<32x32xf32>, vector<2x32xf32> -> vector<2x32xf32>
    %332 = arith.addf %331, %6 : vector<2x32xf32>
    %c0_243 = arith.constant 0 : index
    %c0_244 = arith.constant 0 : index
    %333 = vector.load %arg11[%c0_243, %c0_244] : memref<2x32xf32, #tpu.memory_space<vmem>>, vector<2x32xf32>
    %c0_245 = arith.constant 0 : index
    %c0_246 = arith.constant 0 : index
    %334 = vector.load %arg12[%c0_245, %c0_246] : memref<2x32xf32, #tpu.memory_space<vmem>>, vector<2x32xf32>
    %c0_247 = arith.constant 0 : index
    %c0_248 = arith.constant 0 : index
    %335 = vector.load %arg13[%c0_247, %c0_248] : memref<2x32xf32, #tpu.memory_space<vmem>>, vector<2x32xf32>
    %cst_249 = arith.constant 0.899999976 : f32
    %336 = vector.broadcast %cst_249 : f32 to vector<2x32xf32>
    %337 = arith.mulf %336, %333 : vector<2x32xf32>
    %cst_250 = arith.constant 1.000000e-01 : f32
    %338 = vector.broadcast %cst_250 : f32 to vector<2x32xf32>
    %339 = arith.mulf %338, %334 : vector<2x32xf32>
    %340 = arith.addf %337, %339 : vector<2x32xf32>
    %cst_251 = arith.constant 8.000000e-01 : f32
    %341 = vector.broadcast %cst_251 : f32 to vector<2x32xf32>
    %342 = arith.mulf %341, %334 : vector<2x32xf32>
    %cst_252 = arith.constant 0.999999165 : f32
    %343 = vector.broadcast %cst_252 : f32 to vector<2x32xf32>
    %344 = arith.mulf %343, %335 : vector<2x32xf32>
    %cst_253 = arith.constant 8.33333331E-7 : f32
    %345 = vector.broadcast %cst_253 : f32 to vector<2x32xf32>
    %346 = arith.addf %344, %345 : vector<2x32xf32>
    %347 = arith.subf %340, %346 : vector<2x32xf32>
    %cst_254 = arith.constant 0.000000e+00 : f32
    %348 = vector.broadcast %cst_254 : f32 to vector<2x32xf32>
    %349 = arith.cmpf ogt, %347, %348 : vector<2x32xf32>
    %cst_255 = arith.constant 1.000000e+00 : f32
    %cst_256 = arith.constant 0.000000e+00 : f32
    %350 = vector.broadcast %cst_255 : f32 to vector<2x32xf32>
    %351 = vector.broadcast %cst_256 : f32 to vector<2x32xf32>
    %352 = arith.select %349, %350, %351 : vector<2x32xi1>, vector<2x32xf32>
    %cst_257 = arith.constant 1.000000e+00 : f32
    %353 = vector.broadcast %cst_257 : f32 to vector<2x32xf32>
    %354 = arith.subf %353, %352 : vector<2x32xf32>
    %355 = arith.mulf %354, %340 : vector<2x32xf32>
    %c0_258 = arith.constant 0 : index
    %c0_259 = arith.constant 0 : index
    %356 = vector.load %arg11[%c0_258, %c0_259] : memref<2x32xf32, #tpu.memory_space<vmem>>, vector<2x32xf32>
    tpu.vector_store %arg11[%c0_258, %c0_259], %355 {strides = array<i32>} : memref<2x32xf32, #tpu.memory_space<vmem>>, vector<2x32xf32>,
    %357 = arith.addf %342, %332 : vector<2x32xf32>
    %c0_260 = arith.constant 0 : index
    %c0_261 = arith.constant 0 : index
    %358 = vector.load %arg12[%c0_260, %c0_261] : memref<2x32xf32, #tpu.memory_space<vmem>>, vector<2x32xf32>
    tpu.vector_store %arg12[%c0_260, %c0_261], %357 {strides = array<i32>} : memref<2x32xf32, #tpu.memory_space<vmem>>, vector<2x32xf32>,
    %cst_262 = arith.constant 1.500000e-03 : f32
    %359 = vector.broadcast %cst_262 : f32 to vector<2x32xf32>
    %360 = arith.mulf %352, %359 : vector<2x32xf32>
    %361 = arith.addf %346, %360 : vector<2x32xf32>
    %c0_263 = arith.constant 0 : index
    %c0_264 = arith.constant 0 : index
    %362 = vector.load %arg13[%c0_263, %c0_264] : memref<2x32xf32, #tpu.memory_space<vmem>>, vector<2x32xf32>
    tpu.vector_store %arg13[%c0_263, %c0_264], %361 {strides = array<i32>} : memref<2x32xf32, #tpu.memory_space<vmem>>, vector<2x32xf32>,
    %363 = arith.truncf %352 : vector<2x32xf32> to vector<2x32xbf16>
    %c5_265 = arith.constant 5 : index
    %c0_266 = arith.constant 0 : index
    %c0_267 = arith.constant 0 : index
    %364 = vector.load %arg6[%c5_265, %c0_266, %c0_267] : memref<8x2x32xbf16, #tpu.memory_space<vmem>>, vector<1x2x32xbf16>
    %365 = vector.shape_cast %364 : vector<1x2x32xbf16> to vector<2x32xbf16>
    %366 = vector.shape_cast %363 : vector<2x32xbf16> to vector<1x2x32xbf16>
    tpu.vector_store %arg6[%c5_265, %c0_266, %c0_267], %366 {strides = array<i32>} : memref<8x2x32xbf16, #tpu.memory_space<vmem>>, vector<1x2x32xbf16>,
    %c6 = arith.constant 6 : index
    %c0_268 = arith.constant 0 : index
    %c0_269 = arith.constant 0 : index
    %367 = vector.load %arg1[%c6, %c0_268, %c0_269] : memref<8x2x32xf32, #tpu.memory_space<vmem>>, vector<1x2x32xf32>
    %368 = vector.shape_cast %367 : vector<1x2x32xf32> to vector<2x32xf32>
    %c0_270 = arith.constant 0 : index
    %c0_271 = arith.constant 0 : index
    %369 = vector.load %arg9[%c0_270, %c0_271] : memref<2x32xf32, #tpu.memory_space<vmem>>, vector<2x32xf32>
    %c0_272 = arith.constant 0 : index
    %c0_273 = arith.constant 0 : index
    %370 = vector.load %arg10[%c0_272, %c0_273] : memref<2x32xf32, #tpu.memory_space<vmem>>, vector<2x32xf32>
    %cst_274 = arith.constant 0.899999976 : f32
    %371 = vector.broadcast %cst_274 : f32 to vector<2x32xf32>
    %372 = arith.mulf %371, %369 : vector<2x32xf32>
    %cst_275 = arith.constant 1.000000e-01 : f32
    %373 = vector.broadcast %cst_275 : f32 to vector<2x32xf32>
    %374 = arith.mulf %373, %370 : vector<2x32xf32>
    %375 = arith.addf %372, %374 : vector<2x32xf32>
    %cst_276 = arith.constant 8.000000e-01 : f32
    %376 = vector.broadcast %cst_276 : f32 to vector<2x32xf32>
    %377 = arith.mulf %376, %370 : vector<2x32xf32>
    %cst_277 = arith.constant 1.000000e+00 : f32
    %378 = vector.broadcast %cst_277 : f32 to vector<2x32xf32>
    %379 = arith.subf %375, %378 : vector<2x32xf32>
    %cst_278 = arith.constant 0.000000e+00 : f32
    %380 = vector.broadcast %cst_278 : f32 to vector<2x32xf32>
    %381 = arith.cmpf ogt, %379, %380 : vector<2x32xf32>
    %cst_279 = arith.constant 1.000000e+00 : f32
    %cst_280 = arith.constant 0.000000e+00 : f32
    %382 = vector.broadcast %cst_279 : f32 to vector<2x32xf32>
    %383 = vector.broadcast %cst_280 : f32 to vector<2x32xf32>
    %384 = arith.select %381, %382, %383 : vector<2x32xi1>, vector<2x32xf32>
    %cst_281 = arith.constant 1.000000e+00 : f32
    %385 = vector.broadcast %cst_281 : f32 to vector<2x32xf32>
    %386 = arith.subf %385, %384 : vector<2x32xf32>
    %387 = arith.mulf %386, %375 : vector<2x32xf32>
    %c0_282 = arith.constant 0 : index
    %c0_283 = arith.constant 0 : index
    %388 = vector.load %arg9[%c0_282, %c0_283] : memref<2x32xf32, #tpu.memory_space<vmem>>, vector<2x32xf32>
    tpu.vector_store %arg9[%c0_282, %c0_283], %387 {strides = array<i32>} : memref<2x32xf32, #tpu.memory_space<vmem>>, vector<2x32xf32>,
    %389 = arith.addf %377, %368 : vector<2x32xf32>
    %c0_284 = arith.constant 0 : index
    %c0_285 = arith.constant 0 : index
    %390 = vector.load %arg10[%c0_284, %c0_285] : memref<2x32xf32, #tpu.memory_space<vmem>>, vector<2x32xf32>
    tpu.vector_store %arg10[%c0_284, %c0_285], %389 {strides = array<i32>} : memref<2x32xf32, #tpu.memory_space<vmem>>, vector<2x32xf32>,
    %cst_286 = arith.constant dense<0.000000e+00> : vector<2x32xf32>
    %391 = tpu.matmul %384, %3, %cst_286 {dimension_numbers = #tpu.dot_dimension_numbers<[1], [0], [0], [1], [0, 0, 1, 1], [], []>} : vector<2x32xf32>, vector<32x32xf32>, vector<2x32xf32> -> vector<2x32xf32>
    %392 = arith.addf %391, %6 : vector<2x32xf32>
    %c0_287 = arith.constant 0 : index
    %c0_288 = arith.constant 0 : index
    %393 = vector.load %arg11[%c0_287, %c0_288] : memref<2x32xf32, #tpu.memory_space<vmem>>, vector<2x32xf32>
    %c0_289 = arith.constant 0 : index
    %c0_290 = arith.constant 0 : index
    %394 = vector.load %arg12[%c0_289, %c0_290] : memref<2x32xf32, #tpu.memory_space<vmem>>, vector<2x32xf32>
    %c0_291 = arith.constant 0 : index
    %c0_292 = arith.constant 0 : index
    %395 = vector.load %arg13[%c0_291, %c0_292] : memref<2x32xf32, #tpu.memory_space<vmem>>, vector<2x32xf32>
    %cst_293 = arith.constant 0.899999976 : f32
    %396 = vector.broadcast %cst_293 : f32 to vector<2x32xf32>
    %397 = arith.mulf %396, %393 : vector<2x32xf32>
    %cst_294 = arith.constant 1.000000e-01 : f32
    %398 = vector.broadcast %cst_294 : f32 to vector<2x32xf32>
    %399 = arith.mulf %398, %394 : vector<2x32xf32>
    %400 = arith.addf %397, %399 : vector<2x32xf32>
    %cst_295 = arith.constant 8.000000e-01 : f32
    %401 = vector.broadcast %cst_295 : f32 to vector<2x32xf32>
    %402 = arith.mulf %401, %394 : vector<2x32xf32>
    %cst_296 = arith.constant 0.999999165 : f32
    %403 = vector.broadcast %cst_296 : f32 to vector<2x32xf32>
    %404 = arith.mulf %403, %395 : vector<2x32xf32>
    %cst_297 = arith.constant 8.33333331E-7 : f32
    %405 = vector.broadcast %cst_297 : f32 to vector<2x32xf32>
    %406 = arith.addf %404, %405 : vector<2x32xf32>
    %407 = arith.subf %400, %406 : vector<2x32xf32>
    %cst_298 = arith.constant 0.000000e+00 : f32
    %408 = vector.broadcast %cst_298 : f32 to vector<2x32xf32>
    %409 = arith.cmpf ogt, %407, %408 : vector<2x32xf32>
    %cst_299 = arith.constant 1.000000e+00 : f32
    %cst_300 = arith.constant 0.000000e+00 : f32
    %410 = vector.broadcast %cst_299 : f32 to vector<2x32xf32>
    %411 = vector.broadcast %cst_300 : f32 to vector<2x32xf32>
    %412 = arith.select %409, %410, %411 : vector<2x32xi1>, vector<2x32xf32>
    %cst_301 = arith.constant 1.000000e+00 : f32
    %413 = vector.broadcast %cst_301 : f32 to vector<2x32xf32>
    %414 = arith.subf %413, %412 : vector<2x32xf32>
    %415 = arith.mulf %414, %400 : vector<2x32xf32>
    %c0_302 = arith.constant 0 : index
    %c0_303 = arith.constant 0 : index
    %416 = vector.load %arg11[%c0_302, %c0_303] : memref<2x32xf32, #tpu.memory_space<vmem>>, vector<2x32xf32>
    tpu.vector_store %arg11[%c0_302, %c0_303], %415 {strides = array<i32>} : memref<2x32xf32, #tpu.memory_space<vmem>>, vector<2x32xf32>,
    %417 = arith.addf %402, %392 : vector<2x32xf32>
    %c0_304 = arith.constant 0 : index
    %c0_305 = arith.constant 0 : index
    %418 = vector.load %arg12[%c0_304, %c0_305] : memref<2x32xf32, #tpu.memory_space<vmem>>, vector<2x32xf32>
    tpu.vector_store %arg12[%c0_304, %c0_305], %417 {strides = array<i32>} : memref<2x32xf32, #tpu.memory_space<vmem>>, vector<2x32xf32>,
    %cst_306 = arith.constant 1.500000e-03 : f32
    %419 = vector.broadcast %cst_306 : f32 to vector<2x32xf32>
    %420 = arith.mulf %412, %419 : vector<2x32xf32>
    %421 = arith.addf %406, %420 : vector<2x32xf32>
    %c0_307 = arith.constant 0 : index
    %c0_308 = arith.constant 0 : index
    %422 = vector.load %arg13[%c0_307, %c0_308] : memref<2x32xf32, #tpu.memory_space<vmem>>, vector<2x32xf32>
    tpu.vector_store %arg13[%c0_307, %c0_308], %421 {strides = array<i32>} : memref<2x32xf32, #tpu.memory_space<vmem>>, vector<2x32xf32>,
    %423 = arith.truncf %412 : vector<2x32xf32> to vector<2x32xbf16>
    %c6_309 = arith.constant 6 : index
    %c0_310 = arith.constant 0 : index
    %c0_311 = arith.constant 0 : index
    %424 = vector.load %arg6[%c6_309, %c0_310, %c0_311] : memref<8x2x32xbf16, #tpu.memory_space<vmem>>, vector<1x2x32xbf16>
    %425 = vector.shape_cast %424 : vector<1x2x32xbf16> to vector<2x32xbf16>
    %426 = vector.shape_cast %423 : vector<2x32xbf16> to vector<1x2x32xbf16>
    tpu.vector_store %arg6[%c6_309, %c0_310, %c0_311], %426 {strides = array<i32>} : memref<8x2x32xbf16, #tpu.memory_space<vmem>>, vector<1x2x32xbf16>,
    %c7 = arith.constant 7 : index
    %c0_312 = arith.constant 0 : index
    %c0_313 = arith.constant 0 : index
    %427 = vector.load %arg1[%c7, %c0_312, %c0_313] : memref<8x2x32xf32, #tpu.memory_space<vmem>>, vector<1x2x32xf32>
    %428 = vector.shape_cast %427 : vector<1x2x32xf32> to vector<2x32xf32>
    %c0_314 = arith.constant 0 : index
    %c0_315 = arith.constant 0 : index
    %429 = vector.load %arg9[%c0_314, %c0_315] : memref<2x32xf32, #tpu.memory_space<vmem>>, vector<2x32xf32>
    %c0_316 = arith.constant 0 : index
    %c0_317 = arith.constant 0 : index
    %430 = vector.load %arg10[%c0_316, %c0_317] : memref<2x32xf32, #tpu.memory_space<vmem>>, vector<2x32xf32>
    %cst_318 = arith.constant 0.899999976 : f32
    %431 = vector.broadcast %cst_318 : f32 to vector<2x32xf32>
    %432 = arith.mulf %431, %429 : vector<2x32xf32>
    %cst_319 = arith.constant 1.000000e-01 : f32
    %433 = vector.broadcast %cst_319 : f32 to vector<2x32xf32>
    %434 = arith.mulf %433, %430 : vector<2x32xf32>
    %435 = arith.addf %432, %434 : vector<2x32xf32>
    %cst_320 = arith.constant 8.000000e-01 : f32
    %436 = vector.broadcast %cst_320 : f32 to vector<2x32xf32>
    %437 = arith.mulf %436, %430 : vector<2x32xf32>
    %cst_321 = arith.constant 1.000000e+00 : f32
    %438 = vector.broadcast %cst_321 : f32 to vector<2x32xf32>
    %439 = arith.subf %435, %438 : vector<2x32xf32>
    %cst_322 = arith.constant 0.000000e+00 : f32
    %440 = vector.broadcast %cst_322 : f32 to vector<2x32xf32>
    %441 = arith.cmpf ogt, %439, %440 : vector<2x32xf32>
    %cst_323 = arith.constant 1.000000e+00 : f32
    %cst_324 = arith.constant 0.000000e+00 : f32
    %442 = vector.broadcast %cst_323 : f32 to vector<2x32xf32>
    %443 = vector.broadcast %cst_324 : f32 to vector<2x32xf32>
    %444 = arith.select %441, %442, %443 : vector<2x32xi1>, vector<2x32xf32>
    %cst_325 = arith.constant 1.000000e+00 : f32
    %445 = vector.broadcast %cst_325 : f32 to vector<2x32xf32>
    %446 = arith.subf %445, %444 : vector<2x32xf32>
    %447 = arith.mulf %446, %435 : vector<2x32xf32>
    %c0_326 = arith.constant 0 : index
    %c0_327 = arith.constant 0 : index
    %448 = vector.load %arg9[%c0_326, %c0_327] : memref<2x32xf32, #tpu.memory_space<vmem>>, vector<2x32xf32>
    tpu.vector_store %arg9[%c0_326, %c0_327], %447 {strides = array<i32>} : memref<2x32xf32, #tpu.memory_space<vmem>>, vector<2x32xf32>,
    %449 = arith.addf %437, %428 : vector<2x32xf32>
    %c0_328 = arith.constant 0 : index
    %c0_329 = arith.constant 0 : index
    %450 = vector.load %arg10[%c0_328, %c0_329] : memref<2x32xf32, #tpu.memory_space<vmem>>, vector<2x32xf32>
    tpu.vector_store %arg10[%c0_328, %c0_329], %449 {strides = array<i32>} : memref<2x32xf32, #tpu.memory_space<vmem>>, vector<2x32xf32>,
    %cst_330 = arith.constant dense<0.000000e+00> : vector<2x32xf32>
    %451 = tpu.matmul %444, %3, %cst_330 {dimension_numbers = #tpu.dot_dimension_numbers<[1], [0], [0], [1], [0, 0, 1, 1], [], []>} : vector<2x32xf32>, vector<32x32xf32>, vector<2x32xf32> -> vector<2x32xf32>
    %452 = arith.addf %451, %6 : vector<2x32xf32>
    %c0_331 = arith.constant 0 : index
    %c0_332 = arith.constant 0 : index
    %453 = vector.load %arg11[%c0_331, %c0_332] : memref<2x32xf32, #tpu.memory_space<vmem>>, vector<2x32xf32>
    %c0_333 = arith.constant 0 : index
    %c0_334 = arith.constant 0 : index
    %454 = vector.load %arg12[%c0_333, %c0_334] : memref<2x32xf32, #tpu.memory_space<vmem>>, vector<2x32xf32>
    %c0_335 = arith.constant 0 : index
    %c0_336 = arith.constant 0 : index
    %455 = vector.load %arg13[%c0_335, %c0_336] : memref<2x32xf32, #tpu.memory_space<vmem>>, vector<2x32xf32>
    %cst_337 = arith.constant 0.899999976 : f32
    %456 = vector.broadcast %cst_337 : f32 to vector<2x32xf32>
    %457 = arith.mulf %456, %453 : vector<2x32xf32>
    %cst_338 = arith.constant 1.000000e-01 : f32
    %458 = vector.broadcast %cst_338 : f32 to vector<2x32xf32>
    %459 = arith.mulf %458, %454 : vector<2x32xf32>
    %460 = arith.addf %457, %459 : vector<2x32xf32>
    %cst_339 = arith.constant 8.000000e-01 : f32
    %461 = vector.broadcast %cst_339 : f32 to vector<2x32xf32>
    %462 = arith.mulf %461, %454 : vector<2x32xf32>
    %cst_340 = arith.constant 0.999999165 : f32
    %463 = vector.broadcast %cst_340 : f32 to vector<2x32xf32>
    %464 = arith.mulf %463, %455 : vector<2x32xf32>
    %cst_341 = arith.constant 8.33333331E-7 : f32
    %465 = vector.broadcast %cst_341 : f32 to vector<2x32xf32>
    %466 = arith.addf %464, %465 : vector<2x32xf32>
    %467 = arith.subf %460, %466 : vector<2x32xf32>
    %cst_342 = arith.constant 0.000000e+00 : f32
    %468 = vector.broadcast %cst_342 : f32 to vector<2x32xf32>
    %469 = arith.cmpf ogt, %467, %468 : vector<2x32xf32>
    %cst_343 = arith.constant 1.000000e+00 : f32
    %cst_344 = arith.constant 0.000000e+00 : f32
    %470 = vector.broadcast %cst_343 : f32 to vector<2x32xf32>
    %471 = vector.broadcast %cst_344 : f32 to vector<2x32xf32>
    %472 = arith.select %469, %470, %471 : vector<2x32xi1>, vector<2x32xf32>
    %cst_345 = arith.constant 1.000000e+00 : f32
    %473 = vector.broadcast %cst_345 : f32 to vector<2x32xf32>
    %474 = arith.subf %473, %472 : vector<2x32xf32>
    %475 = arith.mulf %474, %460 : vector<2x32xf32>
    %c0_346 = arith.constant 0 : index
    %c0_347 = arith.constant 0 : index
    %476 = vector.load %arg11[%c0_346, %c0_347] : memref<2x32xf32, #tpu.memory_space<vmem>>, vector<2x32xf32>
    tpu.vector_store %arg11[%c0_346, %c0_347], %475 {strides = array<i32>} : memref<2x32xf32, #tpu.memory_space<vmem>>, vector<2x32xf32>,
    %477 = arith.addf %462, %452 : vector<2x32xf32>
    %c0_348 = arith.constant 0 : index
    %c0_349 = arith.constant 0 : index
    %478 = vector.load %arg12[%c0_348, %c0_349] : memref<2x32xf32, #tpu.memory_space<vmem>>, vector<2x32xf32>
    tpu.vector_store %arg12[%c0_348, %c0_349], %477 {strides = array<i32>} : memref<2x32xf32, #tpu.memory_space<vmem>>, vector<2x32xf32>,
    %cst_350 = arith.constant 1.500000e-03 : f32
    %479 = vector.broadcast %cst_350 : f32 to vector<2x32xf32>
    %480 = arith.mulf %472, %479 : vector<2x32xf32>
    %481 = arith.addf %466, %480 : vector<2x32xf32>
    %c0_351 = arith.constant 0 : index
    %c0_352 = arith.constant 0 : index
    %482 = vector.load %arg13[%c0_351, %c0_352] : memref<2x32xf32, #tpu.memory_space<vmem>>, vector<2x32xf32>
    tpu.vector_store %arg13[%c0_351, %c0_352], %481 {strides = array<i32>} : memref<2x32xf32, #tpu.memory_space<vmem>>, vector<2x32xf32>,
    %483 = arith.truncf %472 : vector<2x32xf32> to vector<2x32xbf16>
    %c7_353 = arith.constant 7 : index
    %c0_354 = arith.constant 0 : index
    %c0_355 = arith.constant 0 : index
    %484 = vector.load %arg6[%c7_353, %c0_354, %c0_355] : memref<8x2x32xbf16, #tpu.memory_space<vmem>>, vector<1x2x32xbf16>
    %485 = vector.shape_cast %484 : vector<1x2x32xbf16> to vector<2x32xbf16>
    %486 = vector.shape_cast %483 : vector<2x32xbf16> to vector<1x2x32xbf16>
    tpu.vector_store %arg6[%c7_353, %c0_354, %c0_355], %486 {strides = array<i32>} : memref<8x2x32xbf16, #tpu.memory_space<vmem>>, vector<1x2x32xbf16>,
    %c1_i32 = arith.constant 1 : i32
    %487 = arith.cmpi eq, %arg0, %c1_i32 : i32
    %488 = arith.extui %487 : i1 to i32
    %c0_i32_356 = arith.constant 0 : i32
    %489 = arith.cmpi ne, %488, %c0_i32_356 : i32
    scf.if %489 {
      %c0_357 = arith.constant 0 : index
      %c0_358 = arith.constant 0 : index
      %490 = vector.load %arg7[%c0_357, %c0_358] : memref<2x96xf32, #tpu.memory_space<vmem>>, vector<2x32xf32>
      tpu.vector_store %arg7[%c0_357, %c0_358], %444 {strides = array<i32>} : memref<2x96xf32, #tpu.memory_space<vmem>>, vector<2x32xf32>,
      %c0_359 = arith.constant 0 : index
      %c0_360 = arith.constant 0 : index
      %491 = vector.load %arg9[%c0_359, %c0_360] : memref<2x32xf32, #tpu.memory_space<vmem>>, vector<2x32xf32>
      %c0_361 = arith.constant 0 : index
      %c32 = arith.constant 32 : index
      %492 = vector.load %arg7[%c0_361, %c32] : memref<2x96xf32, #tpu.memory_space<vmem>>, vector<2x32xf32>
      tpu.vector_store %arg7[%c0_361, %c32], %491 {strides = array<i32>} : memref<2x96xf32, #tpu.memory_space<vmem>>, vector<2x32xf32>,
      %c0_362 = arith.constant 0 : index
      %c0_363 = arith.constant 0 : index
      %493 = vector.load %arg10[%c0_362, %c0_363] : memref<2x32xf32, #tpu.memory_space<vmem>>, vector<2x32xf32>
      %c0_364 = arith.constant 0 : index
      %c64 = arith.constant 64 : index
      %494 = vector.load %arg7[%c0_364, %c64] : memref<2x96xf32, #tpu.memory_space<vmem>>, vector<2x32xf32>
      tpu.vector_store %arg7[%c0_364, %c64], %493 {strides = array<i32>} : memref<2x96xf32, #tpu.memory_space<vmem>>, vector<2x32xf32>,
      %c0_365 = arith.constant 0 : index
      %c0_366 = arith.constant 0 : index
      %495 = vector.load %arg8[%c0_365, %c0_366] : memref<2x128xf32, #tpu.memory_space<vmem>>, vector<2x32xf32>
      tpu.vector_store %arg8[%c0_365, %c0_366], %472 {strides = array<i32>} : memref<2x128xf32, #tpu.memory_space<vmem>>, vector<2x32xf32>,
      %c0_367 = arith.constant 0 : index
      %c0_368 = arith.constant 0 : index
      %496 = vector.load %arg11[%c0_367, %c0_368] : memref<2x32xf32, #tpu.memory_space<vmem>>, vector<2x32xf32>
      %c0_369 = arith.constant 0 : index
      %c32_370 = arith.constant 32 : index
      %497 = vector.load %arg8[%c0_369, %c32_370] : memref<2x128xf32, #tpu.memory_space<vmem>>, vector<2x32xf32>
      tpu.vector_store %arg8[%c0_369, %c32_370], %496 {strides = array<i32>} : memref<2x128xf32, #tpu.memory_space<vmem>>, vector<2x32xf32>,
      %c0_371 = arith.constant 0 : index
      %c0_372 = arith.constant 0 : index
      %498 = vector.load %arg12[%c0_371, %c0_372] : memref<2x32xf32, #tpu.memory_space<vmem>>, vector<2x32xf32>
      %c0_373 = arith.constant 0 : index
      %c64_374 = arith.constant 64 : index
      %499 = vector.load %arg8[%c0_373, %c64_374] : memref<2x128xf32, #tpu.memory_space<vmem>>, vector<2x32xf32>
      tpu.vector_store %arg8[%c0_373, %c64_374], %498 {strides = array<i32>} : memref<2x128xf32, #tpu.memory_space<vmem>>, vector<2x32xf32>,
      %c0_375 = arith.constant 0 : index
      %c0_376 = arith.constant 0 : index
      %500 = vector.load %arg13[%c0_375, %c0_376] : memref<2x32xf32, #tpu.memory_space<vmem>>, vector<2x32xf32>
      %c0_377 = arith.constant 0 : index
      %c96 = arith.constant 96 : index
      %501 = vector.load %arg8[%c0_377, %c96] : memref<2x128xf32, #tpu.memory_space<vmem>>, vector<2x32xf32>
      tpu.vector_store %arg8[%c0_377, %c96], %500 {strides = array<i32>} : memref<2x128xf32, #tpu.memory_space<vmem>>, vector<2x32xf32>,
    } else {
    }
    return
  }
  func.func @transform_0(%arg0: i32) -> (i32, i32, i32) {
    %c0_i32 = arith.constant 0 : i32
    %c0_i32_0 = arith.constant 0 : i32
    %c0_i32_1 = arith.constant 0 : i32
    return %arg0, %c0_i32, %c0_i32_0 : i32, i32, i32
  }
  func.func @transform_1(%arg0: i32) -> (i32, i32) {
    %c0_i32 = arith.constant 0 : i32
    %c0_i32_0 = arith.constant 0 : i32
    %c0_i32_1 = arith.constant 0 : i32
    return %c0_i32, %c0_i32_0 : i32, i32
  }
  func.func @transform_2(%arg0: i32) -> (i32, i32) {
    %c0_i32 = arith.constant 0 : i32
    %c0_i32_0 = arith.constant 0 : i32
    %c0_i32_1 = arith.constant 0 : i32
    return %c0_i32, %c0_i32_0 : i32, i32
  }
  func.func @transform_3(%arg0: i32) -> (i32, i32) {
    %c0_i32 = arith.constant 0 : i32
    %c0_i32_0 = arith.constant 0 : i32
    %c0_i32_1 = arith.constant 0 : i32
    return %c0_i32, %c0_i32_0 : i32, i32
  }
  func.func @transform_4(%arg0: i32) -> (i32, i32) {
    %c0_i32 = arith.constant 0 : i32
    %c0_i32_0 = arith.constant 0 : i32
    %c0_i32_1 = arith.constant 0 : i32
    return %c0_i32, %c0_i32_0 : i32, i32
  }
  func.func @transform_5(%arg0: i32) -> (i32, i32, i32) {
    %c0_i32 = arith.constant 0 : i32
    %c0_i32_0 = arith.constant 0 : i32
    %c0_i32_1 = arith.constant 0 : i32
    return %arg0, %c0_i32, %c0_i32_0 : i32, i32, i32
  }
  func.func @transform_6(%arg0: i32) -> (i32, i32) {
    %c0_i32 = arith.constant 0 : i32
    %c0_i32_0 = arith.constant 0 : i32
    %c0_i32_1 = arith.constant 0 : i32
    return %c0_i32, %c0_i32_0 : i32, i32
  }
  func.func @transform_7(%arg0: i32) -> (i32, i32) {
    %c0_i32 = arith.constant 0 : i32
    %c0_i32_0 = arith.constant 0 : i32
    %c0_i32_1 = arith.constant 0 : i32
    return %c0_i32, %c0_i32_0 : i32, i32
  }
}

</mosaic_0001>

<llo_original>
// kernel: tpu_custom_call.1
$region0: #{tpu_custom_call.1}
  #allocation0 [shape = 'u32[]', space=smem, size = 0x4, offset = 0x4, fixed_abs, tag = 'smem constant byte address 0x4 - core index']
  #allocation1 [shape = 'u32[72,128]{1,0:T(1,128)}', space=vmem, size = 0x9000, scoped, tag = 'internal scratch']
  #allocation2 [shape = 'f32[2,32]{1,0:T(2,128)}', space=vmem, size = 0x400, scoped, tag = 'scratch operand']
  #allocation3 [shape = 'f32[2,32]{1,0:T(2,128)}', space=vmem, size = 0x400, scoped, tag = 'scratch operand']
  #allocation4 [shape = 'f32[2,32]{1,0:T(2,128)}', space=vmem, size = 0x400, scoped, tag = 'scratch operand']
  #allocation5 [shape = 'f32[2,32]{1,0:T(2,128)}', space=vmem, size = 0x400, scoped, tag = 'scratch operand']
  #allocation6 [shape = 'f32[2,32]{1,0:T(2,128)}', space=vmem, size = 0x400, scoped, tag = 'scratch operand']
  %s0 = inlined_call_operand.hbm [shape: f32[16,2,32], index: 0, kind: input, shape index: {}]
  %s1 = inlined_call_operand.hbm [shape: f32[32,32], index: 1, kind: input, shape index: {}]
  %s2 = inlined_call_operand.hbm [shape: f32[1,32], index: 2, kind: input, shape index: {}]
  %s3 = inlined_call_operand.vmem [shape: f32[2,64], index: 3, kind: input, shape index: {}]
  %s4 = inlined_call_operand.hbm [shape: f32[2,96], index: 4, kind: input, shape index: {}]
  %s5 = inlined_call_operand.hbm [shape: bf16[16,2,32], index: 5, kind: output, shape index: {0}]
  %s6 = inlined_call_operand.hbm [shape: f32[2,96], index: 6, kind: output, shape index: {1}]
  %s7 = inlined_call_operand.hbm [shape: f32[2,128], index: 7, kind: output, shape index: {2}]
  %8 = xla_tuple %s5, %s6, %s7
  %s9 = sld [smem:[#allocation0]]
  $region93: #{tpu_custom_call.1} parent=0
    _
  %s11 = ssub.s32 1, %s9
  %s12 = scalar_select 0, %s11, %s9
  $region1: #{tpu_custom_call.1} parent=0
    #allocation7 [shape = 'u8[16384]{0}', space=vmem, size = 0x4000, scoped, tag = 'input window, operand 0']
    #allocation8 [shape = 's32[2]{0}', space=sflag, size = 0x8, scoped, tag = 'scoped memory for tpu_custom_call.1']
    #allocation9 [shape = 's32[2]{0}', space=sflag, size = 0x8, scoped, tag = 'scoped memory for tpu_custom_call.1']
    #allocation10 [shape = 'u8[16384]{0}', space=vmem, size = 0x4000, scoped, tag = 'input window, operand 1, single buffered']
    #allocation11 [shape = 's32[1]{0}', space=sflag, size = 0x4, scoped, tag = 'scoped memory for tpu_custom_call.1']
    #allocation12 [shape = 'u8[512]{0}', space=vmem, size = 0x400, scoped, tag = 'input window, operand 2, single buffered']
    #allocation13 [shape = 'u8[1024]{0}', space=vmem, size = 0x400, scoped, tag = 'input window, operand 4, single buffered']
    #allocation14 [shape = 's32[1]{0}', space=sflag, size = 0x4, scoped, tag = 'scoped memory for tpu_custom_call.1']
    #allocation15 [shape = 'u8[8192]{0}', space=vmem, size = 0x2000, scoped, tag = 'output window, operand 0']
    #allocation16 [shape = 'u8[1024]{0}', space=vmem, size = 0x400, scoped, tag = 'output window, operand 1, single buffered']
    #allocation17 [shape = 's32[1]{0}', space=sflag, size = 0x4, scoped, tag = 'scoped memory for tpu_custom_call.1']
    #allocation18 [shape = 'u8[1024]{0}', space=vmem, size = 0x400, scoped, tag = 'output window, operand 2, single buffered']
    %13 = vsyncpa [#allocation8], 0
    %s14 = scalar_lea.sflag [#allocation8], 1
    %15 = vsyncpa %s14, 0
    %16 = vsyncpa [#allocation11], 0
    %17 = vsyncpa [#allocation14], 0
    %18 = vsyncpa [#allocation9], 0
    %s19 = scalar_lea.sflag [#allocation9], 1
    %20 = vsyncpa %s19, 0
    %21 = vsyncpa [#allocation17], 0
    loop: start=0, step=1, limit=4
    $region2: #{tpu_custom_call.1} parent=1 // loop_pre_header
      _
    $region3: #{tpu_custom_call.1} parent=1 // loop_header
      %s23 = sphi 0, %s27
      %p24 = scmp.ge.s32.totalorder %s23, 4
      %s33 = sphi 0, %s35
      %s36 = sphi 0, %s33
      %s37 = sphi 0, %s36
      %s53 = sphi 0, %s37
      %s57 = sphi 0, %s57
      %s59 = sphi 0, %s57
      %s60 = sphi 0, %s59
      %s74 = sphi 0, %s60
      %s78 = sphi 0, %s78
      %s80 = sphi 0, %s78
      %s81 = sphi 0, %s80
      %s95 = sphi 0, %s81
      %s99 = sphi 0, %s99
      %s101 = sphi 0, %s99
      %s102 = sphi 0, %s101
      %s116 = sphi 0, %s102
      %s120 = sphi 0, %s120
      %s122 = sphi 0, %s120
      %s123 = sphi 0, %s122
      %s137 = sphi 0, %s123
      %s143 = sphi 0, %s145
      %s146 = sphi 0, %s143
      %s147 = sphi 0, %s146
      %s163 = sphi 0, %s147
      %s167 = sphi 0, %s167
      %s169 = sphi 0, %s167
      %s170 = sphi 0, %s169
      %s184 = sphi 0, %s170
      %s188 = sphi 0, %s188
      %s190 = sphi 0, %s188
      %s191 = sphi 0, %s190
      %s205 = sphi 0, %s191
    $region4: #{tpu_custom_call.1} parent=1 // loop_header_branch
      %26 = sbr.rel (%p24) target = $region8
    $region5: #{tpu_custom_call.1} parent=1 // loop_body
      %s28 = ssub.s32 %s23, 1
      %s29 = ssub.s32 %s23, 2
      %s30 = sadd.s32 %s23, 1
      %s31 = ssub.s32 %s23, %s30
      %p32 = scmp.eq.s32.totalorder %s31, 0
      %s34 = sadd.s32 %s33, 1
      %s35 = scalar_select %p32, %s33, %s34
      %p38 = pneg %p32
      %p39 = scmp.eq.s32.totalorder %s23, 1
      %p40 = por %p38, %p39
      %p41 = scmp.ne.s32.totalorder %s33, %s36
      %p42 = scmp.eq.s32.totalorder %s23, 0
      %p43 = por %p41, %p42
      %p44 = scmp.ne.s32.totalorder %s33, %s36
      %p45 = scmp.eq.s32.totalorder %s28, 1
      %p46 = por %p44, %p45
      %p47 = scmp.ne.s32.totalorder %s36, %s37
      %p48 = scmp.eq.s32.totalorder %s28, 0
      %p49 = por %p47, %p48
      %p50 = scmp.ne.s32.totalorder %s36, %s37
      %p51 = scmp.eq.s32.totalorder %s29, 1
      %p52 = por %p50, %p51
      %p54 = scmp.ne.s32.totalorder %s37, %s53
      %p55 = scmp.eq.s32.totalorder %s29, 0
      %p56 = por %p54, %p55
      %s58 = sadd.s32 %s57, 1
      %p61 = scmp.eq.s32.totalorder %s23, 1
      %p62 = scmp.ne.s32.totalorder %s57, %s59
      %p63 = scmp.eq.s32.totalorder %s23, 0
      %p64 = por %p62, %p63
      %p65 = scmp.ne.s32.totalorder %s57, %s59
      %p66 = scmp.eq.s32.totalorder %s28, 1
      %p67 = por %p65, %p66
      %p68 = scmp.ne.s32.totalorder %s59, %s60
      %p69 = scmp.eq.s32.totalorder %s28, 0
      %p70 = por %p68, %p69
      %p71 = scmp.ne.s32.totalorder %s59, %s60
      %p72 = scmp.eq.s32.totalorder %s29, 1
      %p73 = por %p71, %p72
      %p75 = scmp.ne.s32.totalorder %s60, %s74
      %p76 = scmp.eq.s32.totalorder %s29, 0
      %p77 = por %p75, %p76
      %s79 = sadd.s32 %s78, 1
      %p82 = scmp.eq.s32.totalorder %s23, 1
      %p83 = scmp.ne.s32.totalorder %s78, %s80
      %p84 = scmp.eq.s32.totalorder %s23, 0
      %p85 = por %p83, %p84
      %p86 = scmp.ne.s32.totalorder %s78, %s80
      %p87 = scmp.eq.s32.totalorder %s28, 1
      %p88 = por %p86, %p87
      %p89 = scmp.ne.s32.totalorder %s80, %s81
      %p90 = scmp.eq.s32.totalorder %s28, 0
      %p91 = por %p89, %p90
      %p92 = scmp.ne.s32.totalorder %s80, %s81
      %p93 = scmp.eq.s32.totalorder %s29, 1
      %p94 = por %p92, %p93
      %p96 = scmp.ne.s32.totalorder %s81, %s95
      %p97 = scmp.eq.s32.totalorder %s29, 0
      %p98 = por %p96, %p97
      %s100 = sadd.s32 %s99, 1
      %p103 = scmp.eq.s32.totalorder %s23, 1
      %p104 = scmp.ne.s32.totalorder %s99, %s101
      %p105 = scmp.eq.s32.totalorder %s23, 0
      %p106 = por %p104, %p105
      %p107 = scmp.ne.s32.totalorder %s99, %s101
      %p108 = scmp.eq.s32.totalorder %s28, 1
      %p109 = por %p107, %p108
      %p110 = scmp.ne.s32.totalorder %s101, %s102
      %p111 = scmp.eq.s32.totalorder %s28, 0
      %p112 = por %p110, %p111
      %p113 = scmp.ne.s32.totalorder %s101, %s102
      %p114 = scmp.eq.s32.totalorder %s29, 1
      %p115 = por %p113, %p114
      %p117 = scmp.ne.s32.totalorder %s102, %s116
      %p118 = scmp.eq.s32.totalorder %s29, 0
      %p119 = por %p117, %p118
      %s121 = sadd.s32 %s120, 1
      %p124 = scmp.eq.s32.totalorder %s23, 1
      %p125 = scmp.ne.s32.totalorder %s120, %s122
      %p126 = scmp.eq.s32.totalorder %s23, 0
      %p127 = por %p125, %p126
      %p128 = scmp.ne.s32.totalorder %s120, %s122
      %p129 = scmp.eq.s32.totalorder %s28, 1
      %p130 = por %p128, %p129
      %p131 = scmp.ne.s32.totalorder %s122, %s123
      %p132 = scmp.eq.s32.totalorder %s28, 0
      %p133 = por %p131, %p132
      %p134 = scmp.ne.s32.totalorder %s122, %s123
      %p135 = scmp.eq.s32.totalorder %s29, 1
      %p136 = por %p134, %p135
      %p138 = scmp.ne.s32.totalorder %s123, %s137
      %p139 = scmp.eq.s32.totalorder %s29, 0
      %p140 = por %p138, %p139
      %s141 = ssub.s32 %s23, %s30
      %p142 = scmp.eq.s32.totalorder %s141, 0
      %s144 = sadd.s32 %s143, 1
      %s145 = scalar_select %p142, %s143, %s144
      %p148 = pneg %p142
      %p149 = scmp.eq.s32.totalorder %s23, 1
      %p150 = por %p148, %p149
      %p151 = scmp.ne.s32.totalorder %s143, %s146
      %p152 = scmp.eq.s32.totalorder %s23, 0
      %p153 = por %p151, %p152
      %p154 = scmp.ne.s32.totalorder %s143, %s146
      %p155 = scmp.eq.s32.totalorder %s28, 1
      %p156 = por %p154, %p155
      %p157 = scmp.ne.s32.totalorder %s146, %s147
      %p158 = scmp.eq.s32.totalorder %s28, 0
      %p159 = por %p157, %p158
      %p160 = scmp.ne.s32.totalorder %s146, %s147
      %p161 = scmp.eq.s32.totalorder %s29, 1
      %p162 = por %p160, %p161
      %p164 = scmp.ne.s32.totalorder %s147, %s163
      %p165 = scmp.eq.s32.totalorder %s29, 0
      %p166 = por %p164, %p165
      %s168 = sadd.s32 %s167, 1
      %p171 = scmp.eq.s32.totalorder %s23, 1
      %p172 = scmp.ne.s32.totalorder %s167, %s169
      %p173 = scmp.eq.s32.totalorder %s23, 0
      %p174 = por %p172, %p173
      %p175 = scmp.ne.s32.totalorder %s167, %s169
      %p176 = scmp.eq.s32.totalorder %s28, 1
      %p177 = por %p175, %p176
      %p178 = scmp.ne.s32.totalorder %s169, %s170
      %p179 = scmp.eq.s32.totalorder %s28, 0
      %p180 = por %p178, %p179
      %p181 = scmp.ne.s32.totalorder %s169, %s170
      %p182 = scmp.eq.s32.totalorder %s29, 1
      %p183 = por %p181, %p182
      %p185 = scmp.ne.s32.totalorder %s170, %s184
      %p186 = scmp.eq.s32.totalorder %s29, 0
      %p187 = por %p185, %p186
      %s189 = sadd.s32 %s188, 1
      %p192 = scmp.eq.s32.totalorder %s23, 1
      %p193 = scmp.ne.s32.totalorder %s188, %s190
      %p194 = scmp.eq.s32.totalorder %s23, 0
      %p195 = por %p193, %p194
      %p196 = scmp.ne.s32.totalorder %s188, %s190
      %p197 = scmp.eq.s32.totalorder %s28, 1
      %p198 = por %p196, %p197
      %p199 = scmp.ne.s32.totalorder %s190, %s191
      %p200 = scmp.eq.s32.totalorder %s28, 0
      %p201 = por %p199, %p200
      %p202 = scmp.ne.s32.totalorder %s190, %s191
      %p203 = scmp.eq.s32.totalorder %s29, 1
      %p204 = por %p202, %p203
      %p206 = scmp.ne.s32.totalorder %s191, %s205
      %p207 = scmp.eq.s32.totalorder %s29, 0
      %p208 = por %p206, %p207
      %p209 = scmp.le.s32.totalorder 1, %s23
      %p210 = scmp.lt.s32.totalorder %s23, 3
      %p211 = pnand %p209, %p210
      %p212 = pneg %p211
      // Predicated region
      $region9: #{tpu_custom_call.1} parent=5 // pred_check
        _
      $region10: #{tpu_custom_call.1} parent=5 // pred_check_branch
        %214 = sbr.rel (%p211) target = $region12
      $region11: #{tpu_custom_call.1} parent=5 // pred_region
        %s215 = ssub.s32 %s23, 1
        // Predicated region
        $region13: #{tpu_custom_call.1} parent=11 // pred_check
          %p216 = pneg %p70
        $region14: #{tpu_custom_call.1} parent=11 // pred_check_branch
          %218 = sbr.rel (%p216) target = $region16
        $region15: #{tpu_custom_call.1} parent=11 // pred_region
          %220 = vsyncadd [#allocation11], 0
          %s221 = sshll.u32 %s1, 4
          %s222 = int_to_ptr.hbm [resolvable:$true] %s221
          %s223 = sshll.u32 [#allocation10], 4
          %s224 = int_to_ptr.vmem [resolvable:$true] %s223
          %229 = dma.hbm_to_vmem [thread:$0]  %s222, 512, %s224, [#allocation11], 128, 128, 8
        $region16: #{tpu_custom_call.1} parent=11 // pred_fallthru
          _
        // Predicated region
        $region17: #{tpu_custom_call.1} parent=11 // pred_check
          %p230 = pneg %p91
        $region18: #{tpu_custom_call.1} parent=11 // pred_check_branch
          %232 = sbr.rel (%p230) target = $region20
        $region19: #{tpu_custom_call.1} parent=11 // pred_region
          %234 = vsyncadd [#allocation11], 0
          %s236 = sshll.u32 %s2, 4
          %s237 = int_to_ptr.hbm [resolvable:$true] %s236
          %s238 = sshll.u32 [#allocation12], 4
          %s239 = int_to_ptr.vmem [resolvable:$true] %s238
          %241 = dma.hbm_to_vmem [thread:$0]  %s237, 16, %s239, [#allocation11]
        $region20: #{tpu_custom_call.1} parent=11 // pred_fallthru
          _
        // Predicated region
        $region21: #{tpu_custom_call.1} parent=11 // pred_check
          %p242 = pneg %p112
        $region22: #{tpu_custom_call.1} parent=11 // pred_check_branch
          %244 = sbr.rel (%p242) target = $region24
        $region23: #{tpu_custom_call.1} parent=11 // pred_region
          _
        $region24: #{tpu_custom_call.1} parent=11 // pred_fallthru
          _
        // Predicated region
        $region25: #{tpu_custom_call.1} parent=11 // pred_check
          %p245 = pneg %p133
        $region26: #{tpu_custom_call.1} parent=11 // pred_check_branch
          %247 = sbr.rel (%p245) target = $region28
        $region27: #{tpu_custom_call.1} parent=11 // pred_region
          %249 = vsyncadd [#allocation14], 0
          %s251 = sshll.u32 %s4, 4
          %s252 = int_to_ptr.hbm [resolvable:$true] %s251
          %s253 = sshll.u32 [#allocation13], 4
          %s254 = int_to_ptr.vmem [resolvable:$true] %s253
          %256 = dma.hbm_to_vmem [thread:$0]  %s252, 32, %s254, [#allocation14]
        $region28: #{tpu_custom_call.1} parent=11 // pred_fallthru
          _
      $region12: #{tpu_custom_call.1} parent=5 // pred_fallthru
        _
      %p257 = scmp.lt.s32.totalorder %s23, 2
      // Predicated region
      $region29: #{tpu_custom_call.1} parent=5 // pred_check
        %p258 = pneg %p257
      $region30: #{tpu_custom_call.1} parent=5 // pred_check_branch
        %260 = sbr.rel (%p258) target = $region32
      $region31: #{tpu_custom_call.1} parent=5 // pred_region
        // Predicated region
        $region33: #{tpu_custom_call.1} parent=31 // pred_check
          %p261 = pneg %p43
        $region34: #{tpu_custom_call.1} parent=31 // pred_check_branch
          %263 = sbr.rel (%p261) target = $region36
        $region35: #{tpu_custom_call.1} parent=31 // pred_region
          %s264 = sand.u32 %s33, 1
          %s265 = scalar_lea.sflag [#allocation8], %s264
          %s266 = sand.u32 %s33, 1
          %s267 = smul.addr %s266, 16
          %s268 = scalar_lea.vmem [#allocation7], %s267
          %s269 = smul.u32 8, %s23
          %271 = vsyncadd %s265, 0
          %s272 = smul.addr %s269, 2
          %s273 = scalar_lea.hbm %s0, %s272
          %s274 = sshll.u32 %s273, 4
          %s275 = int_to_ptr.hbm [resolvable:$true] %s274
          %s276 = sshll.u32 %s268, 4
          %s277 = int_to_ptr.vmem [resolvable:$true] %s276
          %282 = dma.hbm_to_vmem [thread:$0]  %s275, 256, %s277, %s265, 32, 32, 2
        $region36: #{tpu_custom_call.1} parent=31 // pred_fallthru
          _
      $region32: #{tpu_custom_call.1} parent=5 // pred_fallthru
        _
      %p283 = scmp.le.s32.totalorder 1, %s23
      %p284 = scmp.lt.s32.totalorder %s23, 3
      %p285 = pnand %p283, %p284
      %p286 = pneg %p285
      // Predicated region
      $region37: #{tpu_custom_call.1} parent=5 // pred_check
        _
      $region38: #{tpu_custom_call.1} parent=5 // pred_check_branch
        %288 = sbr.rel (%p285) target = $region40
      $region39: #{tpu_custom_call.1} parent=5 // pred_region
        %s289 = ssub.s32 %s23, 1
        %s290 = sand.u32 %s36, 1
        %s291 = scalar_lea.sflag [#allocation8], %s290
        %s292 = sand.u32 %s36, 1
        %s293 = smul.addr %s292, 16
        %s294 = scalar_lea.vmem [#allocation7], %s293
        // Predicated region
        $region41: #{tpu_custom_call.1} parent=39 // pred_check
          %p295 = pneg %p49
        $region42: #{tpu_custom_call.1} parent=39 // pred_check_branch
          %297 = sbr.rel (%p295) target = $region44
        $region43: #{tpu_custom_call.1} parent=39 // pred_region
          %299 = dma.done %s291, 256
        $region44: #{tpu_custom_call.1} parent=39 // pred_fallthru
          _
        // Predicated region
        $region45: #{tpu_custom_call.1} parent=39 // pred_check
          %p300 = pneg %p70
        $region46: #{tpu_custom_call.1} parent=39 // pred_check_branch
          %302 = sbr.rel (%p300) target = $region48
        $region47: #{tpu_custom_call.1} parent=39 // pred_region
          %304 = dma.done [#allocation11], 512
        $region48: #{tpu_custom_call.1} parent=39 // pred_fallthru
          _
        // Predicated region
        $region49: #{tpu_custom_call.1} parent=39 // pred_check
          %p305 = pneg %p91
        $region50: #{tpu_custom_call.1} parent=39 // pred_check_branch
          %307 = sbr.rel (%p305) target = $region52
        $region51: #{tpu_custom_call.1} parent=39 // pred_region
          %309 = dma.done [#allocation11], 16
        $region52: #{tpu_custom_call.1} parent=39 // pred_fallthru
          _
        // Predicated region
        $region53: #{tpu_custom_call.1} parent=39 // pred_check
          %p310 = pneg %p133
        $region54: #{tpu_custom_call.1} parent=39 // pred_check_branch
          %312 = sbr.rel (%p310) target = $region56
        $region55: #{tpu_custom_call.1} parent=39 // pred_region
          %314 = dma.done [#allocation14], 32
        $region56: #{tpu_custom_call.1} parent=39 // pred_fallthru
          _
        %s315 = sand.u32 %s36, 1
        %s316 = scalar_lea.sflag [#allocation8], %s315
        %s317 = sand.u32 %s36, 1
        %s318 = smul.addr %s317, 16
        %s319 = scalar_lea.vmem [#allocation7], %s318
        %p320 = pneg %p49
        %p321 = pneg %p46
        %p322 = pneg %p70
        %p323 = pneg %p67
        %p324 = pneg %p91
        %p325 = pneg %p88
        %p326 = pneg %p112
        %p327 = pneg %p109
        %p328 = pneg %p133
        %p329 = pneg %p130
        %p330 = pneg %p159
        %p331 = pneg %p156
        %s332 = sand.u32 %s146, 1
        %s333 = scalar_lea.sflag [#allocation9], %s332
        %s334 = sand.u32 %s146, 1
        %s335 = smul.addr %s334, 8
        %s336 = scalar_lea.vmem [#allocation15], %s335
        %p337 = pneg %p180
        %p338 = pneg %p177
        %p339 = pneg %p201
        %p340 = pneg %p198
        %s341 = smul.u32 8, %s28
        %s342 = smul.u32 8, %s28
        %p343 = scmp.eq.s32.totalorder %s28, 0
        // Predicated region
        $region57: #{tpu_custom_call.1} parent=39 // pred_check
          %p344 = pneg %p343
        $region58: #{tpu_custom_call.1} parent=39 // pred_check_branch
          %346 = sbr.rel (%p344) target = $region60
        $region59: #{tpu_custom_call.1} parent=39 // pred_region
          %v347 = vld [vmem:[%s3] sm:$0x3]
          %vm348 = vcmask 254976
          %349 = vst.msk [vmem:[#allocation2] sm:$0x3] %vm348, %v347
          %v350 = vld [vmem:[%s3] sm:$0x3]
          %352 = vrot.lane.b32.xlu0 %v350, 96
          %v353 = vpop.permute.xlu0 %352
          %355 = vst.msk [vmem:[#allocation3] sm:$0x3] %vm348, %v353
          %v356 = vld [vmem:[#allocation13] sm:$0x3]
          %357 = vst.msk [vmem:[#allocation4] sm:$0x3] %vm348, %v356
          %v358 = vld [vmem:[#allocation13] sm:$0x3]
          %360 = vrot.lane.b32.xlu0 %v358, 96
          %v361 = vpop.permute.xlu0 %360
          %363 = vst.msk [vmem:[#allocation5] sm:$0x3] %vm348, %v361
          %v364 = vld [vmem:[#allocation13] sm:$0x3]
          %366 = vrot.lane.b32.xlu0 %v364, 64
          %v367 = vpop.permute.xlu0 %366
          %369 = vst.msk [vmem:[#allocation6] sm:$0x3] %vm348, %v367
        $region60: #{tpu_custom_call.1} parent=39 // pred_fallthru
          _
        %v370 = vld [vmem:[#allocation10] sm:$0xff]
        %v371 = vld [vmem:[#allocation10 + $0x8] sm:$0xff]
        %v372 = vld [vmem:[#allocation10 + $0x10] sm:$0xff]
        %v373 = vld [vmem:[#allocation10 + $0x18] sm:$0xff]
        %v374 = vld [vmem:[#allocation12] sm:$0x1]
        %v376 = vperm.slane %v374, 0
        %v378 = vld [vmem:[%s294] sm:$0x3]
        %v379 = vld [vmem:[#allocation2] sm:$0x3]
        %v380 = vld [vmem:[#allocation3] sm:$0x3]
        %v381 = vmul.f32 %v379, 0.9
        %v382 = vmul.f32 %v380, 0.1
        %v383 = vadd.f32 %v381, %v382
        %v384 = vmul.f32 %v380, 0.8
        %v385 = vsub.f32 %v383, 1.0
        %vm386 = vcmp.gt.f32.partialorder %v385, 0.0
        %v387 = vsel %vm386, 1.0, 0.0
        %v388 = vsub.f32 1.0, %v387
        %v389 = vmul.f32 %v388, %v383
        %vm390 = vcmask 254976
        %391 = vst.msk [vmem:[#allocation2] sm:$0x3] %vm390, %v389
        %v392 = vadd.f32 %v384, %v378
        %393 = vst.msk [vmem:[#allocation3] sm:$0x3] %vm390, %v392
        %vm394 = vcmask 261120
        %v396 = vsel %vm394, %v387, 0
        %398 = vmatpush.msra.mxu0 0.0
        %399 = vmatpush.msra.mxu0 0.0
        %400 = vmatpush.msra.mxu0 0.0
        %401 = vmatpush.msra.mxu0 0.0
        %402 = vmatpush.msra.mxu0 0.0
        %403 = vmatpush.msra.mxu0 0.0
        %404 = vmatpush.msra.mxu0 0.0
        %405 = vmatpush.msra.mxu0 0.0
        %406 = vmatpush.msra.mxu0 0.0
        %407 = vmatpush.msra.mxu0 0.0
        %408 = vmatpush.msra.mxu0 0.0
        %409 = vmatpush.msra.mxu0 0.0
        %410 = vmatpush.msra.mxu0 %v373
        %411 = vmatpush.msra.mxu0 %v372
        %412 = vmatpush.msra.mxu0 %v371
        %413 = vmatpush.msra.mxu0 %v370
        %414 = vmatmul.f32.gmra.mxu0 %v396
        %v415 = vpop.f32.mrf.mxu0
        %v416 = vadd.f32 %v376, %v415
        %417 = vdwg.mxu0
        %v418 = vld [vmem:[#allocation4] sm:$0x3]
        %v419 = vld [vmem:[#allocation5] sm:$0x3]
        %v420 = vld [vmem:[#allocation6] sm:$0x3]
        %v421 = vmul.f32 %v418, 0.9
        %v422 = vmul.f32 %v419, 0.1
        %v423 = vadd.f32 %v421, %v422
        %v424 = vmul.f32 %v419, 0.8
        %v425 = vmul.f32 %v420, 0.99999917
        %v426 = vadd.f32 %v425, 8.3333333e-07
        %v427 = vsub.f32 %v423, %v426
        %vm428 = vcmp.gt.f32.partialorder %v427, 0.0
        %v429 = vsel %vm428, 1.0, 0.0
        %v430 = vsub.f32 1.0, %v429
        %v431 = vmul.f32 %v430, %v423
        %432 = vst.msk [vmem:[#allocation4] sm:$0x3] %vm390, %v431
        %v433 = vadd.f32 %v424, %v416
        %434 = vst.msk [vmem:[#allocation5] sm:$0x3] %vm390, %v433
        %v435 = vmul.f32 %v429, 0.0015
        %v436 = vadd.f32 %v426, %v435
        %437 = vst.msk [vmem:[#allocation6] sm:$0x3] %vm390, %v436
        %v438 = vpack.c.bf16 %v429, %v429
        %vm439 = vcmask 253952
        %440 = vst.msk [vmem:[%s336] sm:$0x1] %vm439, %v438
        %s441 = scalar_lea.vmem %s294, 2 [#allocation7]
        %v442 = vld [vmem:[%s441] sm:$0x3]
        %v443 = vld [vmem:[#allocation2] sm:$0x3]
        %v444 = vld [vmem:[#allocation3] sm:$0x3]
        %v445 = vmul.f32 %v443, 0.9
        %v446 = vmul.f32 %v444, 0.1
        %v447 = vadd.f32 %v445, %v446
        %v448 = vmul.f32 %v444, 0.8
        %v449 = vsub.f32 %v447, 1.0
        %vm450 = vcmp.gt.f32.partialorder %v449, 0.0
        %v451 = vsel %vm450, 1.0, 0.0
        %v452 = vsub.f32 1.0, %v451
        %v453 = vmul.f32 %v452, %v447
        %454 = vst.msk [vmem:[#allocation2] sm:$0x3] %vm390, %v453
        %v455 = vadd.f32 %v448, %v442
        %456 = vst.msk [vmem:[#allocation3] sm:$0x3] %vm390, %v455
        %v458 = vsel %vm394, %v451, 0
        %460 = vmatpush.msra.mxu0 0.0
        %461 = vmatpush.msra.mxu0 0.0
        %462 = vmatpush.msra.mxu0 0.0
        %463 = vmatpush.msra.mxu0 0.0
        %464 = vmatpush.msra.mxu0 0.0
        %465 = vmatpush.msra.mxu0 0.0
        %466 = vmatpush.msra.mxu0 0.0
        %467 = vmatpush.msra.mxu0 0.0
        %468 = vmatpush.msra.mxu0 0.0
        %469 = vmatpush.msra.mxu0 0.0
        %470 = vmatpush.msra.mxu0 0.0
        %471 = vmatpush.msra.mxu0 0.0
        %472 = vmatpush.msra.mxu0 %v373
        %473 = vmatpush.msra.mxu0 %v372
        %474 = vmatpush.msra.mxu0 %v371
        %475 = vmatpush.msra.mxu0 %v370
        %476 = vmatmul.f32.gmra.mxu0 %v458
        %v477 = vpop.f32.mrf.mxu0
        %v478 = vadd.f32 %v376, %v477
        %479 = vdwg.mxu0
        %v480 = vld [vmem:[#allocation4] sm:$0x3]
        %v481 = vld [vmem:[#allocation5] sm:$0x3]
        %v482 = vld [vmem:[#allocation6] sm:$0x3]
        %v483 = vmul.f32 %v480, 0.9
        %v484 = vmul.f32 %v481, 0.1
        %v485 = vadd.f32 %v483, %v484
        %v486 = vmul.f32 %v481, 0.8
        %v487 = vmul.f32 %v482, 0.99999917
        %v488 = vadd.f32 %v487, 8.3333333e-07
        %v489 = vsub.f32 %v485, %v488
        %vm490 = vcmp.gt.f32.partialorder %v489, 0.0
        %v491 = vsel %vm490, 1.0, 0.0
        %v492 = vsub.f32 1.0, %v491
        %v493 = vmul.f32 %v492, %v485
        %494 = vst.msk [vmem:[#allocation4] sm:$0x3] %vm390, %v493
        %v495 = vadd.f32 %v486, %v478
        %496 = vst.msk [vmem:[#allocation5] sm:$0x3] %vm390, %v495
        %v497 = vmul.f32 %v491, 0.0015
        %v498 = vadd.f32 %v488, %v497
        %499 = vst.msk [vmem:[#allocation6] sm:$0x3] %vm390, %v498
        %v500 = vpack.c.bf16 %v491, %v491
        %s501 = scalar_lea.vmem %s336, 1 [#allocation15]
        %502 = vst.msk [vmem:[%s501] sm:$0x1] %vm439, %v500
        %s503 = scalar_lea.vmem %s294, 4 [#allocation7]
        %v504 = vld [vmem:[%s503] sm:$0x3]
        %v505 = vld [vmem:[#allocation2] sm:$0x3]
        %v506 = vld [vmem:[#allocation3] sm:$0x3]
        %v507 = vmul.f32 %v505, 0.9
        %v508 = vmul.f32 %v506, 0.1
        %v509 = vadd.f32 %v507, %v508
        %v510 = vmul.f32 %v506, 0.8
        %v511 = vsub.f32 %v509, 1.0
        %vm512 = vcmp.gt.f32.partialorder %v511, 0.0
        %v513 = vsel %vm512, 1.0, 0.0
        %v514 = vsub.f32 1.0, %v513
        %v515 = vmul.f32 %v514, %v509
        %516 = vst.msk [vmem:[#allocation2] sm:$0x3] %vm390, %v515
        %v517 = vadd.f32 %v510, %v504
        %518 = vst.msk [vmem:[#allocation3] sm:$0x3] %vm390, %v517
        %v520 = vsel %vm394, %v513, 0
        %522 = vmatpush.msra.mxu0 0.0
        %523 = vmatpush.msra.mxu0 0.0
        %524 = vmatpush.msra.mxu0 0.0
        %525 = vmatpush.msra.mxu0 0.0
        %526 = vmatpush.msra.mxu0 0.0
        %527 = vmatpush.msra.mxu0 0.0
        %528 = vmatpush.msra.mxu0 0.0
        %529 = vmatpush.msra.mxu0 0.0
        %530 = vmatpush.msra.mxu0 0.0
        %531 = vmatpush.msra.mxu0 0.0
        %532 = vmatpush.msra.mxu0 0.0
        %533 = vmatpush.msra.mxu0 0.0
        %534 = vmatpush.msra.mxu0 %v373
        %535 = vmatpush.msra.mxu0 %v372
        %536 = vmatpush.msra.mxu0 %v371
        %537 = vmatpush.msra.mxu0 %v370
        %538 = vmatmul.f32.gmra.mxu0 %v520
        %v539 = vpop.f32.mrf.mxu0
        %v540 = vadd.f32 %v376, %v539
        %541 = vdwg.mxu0
        %v542 = vld [vmem:[#allocation4] sm:$0x3]
        %v543 = vld [vmem:[#allocation5] sm:$0x3]
        %v544 = vld [vmem:[#allocation6] sm:$0x3]
        %v545 = vmul.f32 %v542, 0.9
        %v546 = vmul.f32 %v543, 0.1
        %v547 = vadd.f32 %v545, %v546
        %v548 = vmul.f32 %v543, 0.8
        %v549 = vmul.f32 %v544, 0.99999917
        %v550 = vadd.f32 %v549, 8.3333333e-07
        %v551 = vsub.f32 %v547, %v550
        %vm552 = vcmp.gt.f32.partialorder %v551, 0.0
        %v553 = vsel %vm552, 1.0, 0.0
        %v554 = vsub.f32 1.0, %v553
        %v555 = vmul.f32 %v554, %v547
        %556 = vst.msk [vmem:[#allocation4] sm:$0x3] %vm390, %v555
        %v557 = vadd.f32 %v548, %v540
        %558 = vst.msk [vmem:[#allocation5] sm:$0x3] %vm390, %v557
        %v559 = vmul.f32 %v553, 0.0015
        %v560 = vadd.f32 %v550, %v559
        %561 = vst.msk [vmem:[#allocation6] sm:$0x3] %vm390, %v560
        %v562 = vpack.c.bf16 %v553, %v553
        %s563 = scalar_lea.vmem %s336, 2 [#allocation15]
        %564 = vst.msk [vmem:[%s563] sm:$0x1] %vm439, %v562
        %s565 = scalar_lea.vmem %s294, 6 [#allocation7]
        %v566 = vld [vmem:[%s565] sm:$0x3]
        %v567 = vld [vmem:[#allocation2] sm:$0x3]
        %v568 = vld [vmem:[#allocation3] sm:$0x3]
        %v569 = vmul.f32 %v567, 0.9
        %v570 = vmul.f32 %v568, 0.1
        %v571 = vadd.f32 %v569, %v570
        %v572 = vmul.f32 %v568, 0.8
        %v573 = vsub.f32 %v571, 1.0
        %vm574 = vcmp.gt.f32.partialorder %v573, 0.0
        %v575 = vsel %vm574, 1.0, 0.0
        %v576 = vsub.f32 1.0, %v575
        %v577 = vmul.f32 %v576, %v571
        %578 = vst.msk [vmem:[#allocation2] sm:$0x3] %vm390, %v577
        %v579 = vadd.f32 %v572, %v566
        %580 = vst.msk [vmem:[#allocation3] sm:$0x3] %vm390, %v579
        %v582 = vsel %vm394, %v575, 0
        %584 = vmatpush.msra.mxu0 0.0
        %585 = vmatpush.msra.mxu0 0.0
        %586 = vmatpush.msra.mxu0 0.0
        %587 = vmatpush.msra.mxu0 0.0
        %588 = vmatpush.msra.mxu0 0.0
        %589 = vmatpush.msra.mxu0 0.0
        %590 = vmatpush.msra.mxu0 0.0
        %591 = vmatpush.msra.mxu0 0.0
        %592 = vmatpush.msra.mxu0 0.0
        %593 = vmatpush.msra.mxu0 0.0
        %594 = vmatpush.msra.mxu0 0.0
        %595 = vmatpush.msra.mxu0 0.0
        %596 = vmatpush.msra.mxu0 %v373
        %597 = vmatpush.msra.mxu0 %v372
        %598 = vmatpush.msra.mxu0 %v371
        %599 = vmatpush.msra.mxu0 %v370
        %600 = vmatmul.f32.gmra.mxu0 %v582
        %v601 = vpop.f32.mrf.mxu0
        %v602 = vadd.f32 %v376, %v601
        %603 = vdwg.mxu0
        %v604 = vld [vmem:[#allocation4] sm:$0x3]
        %v605 = vld [vmem:[#allocation5] sm:$0x3]
        %v606 = vld [vmem:[#allocation6] sm:$0x3]
        %v607 = vmul.f32 %v604, 0.9
        %v608 = vmul.f32 %v605, 0.1
        %v609 = vadd.f32 %v607, %v608
        %v610 = vmul.f32 %v605, 0.8
        %v611 = vmul.f32 %v606, 0.99999917
        %v612 = vadd.f32 %v611, 8.3333333e-07
        %v613 = vsub.f32 %v609, %v612
        %vm614 = vcmp.gt.f32.partialorder %v613, 0.0
        %v615 = vsel %vm614, 1.0, 0.0
        %v616 = vsub.f32 1.0, %v615
        %v617 = vmul.f32 %v616, %v609
        %618 = vst.msk [vmem:[#allocation4] sm:$0x3] %vm390, %v617
        %v619 = vadd.f32 %v610, %v602
        %620 = vst.msk [vmem:[#allocation5] sm:$0x3] %vm390, %v619
        %v621 = vmul.f32 %v615, 0.0015
        %v622 = vadd.f32 %v612, %v621
        %623 = vst.msk [vmem:[#allocation6] sm:$0x3] %vm390, %v622
        %v624 = vpack.c.bf16 %v615, %v615
        %s625 = scalar_lea.vmem %s336, 3 [#allocation15]
        %626 = vst.msk [vmem:[%s625] sm:$0x1] %vm439, %v624
        %s627 = scalar_lea.vmem %s294, 8 [#allocation7]
        %v628 = vld [vmem:[%s627] sm:$0x3]
        %v629 = vld [vmem:[#allocation2] sm:$0x3]
        %v630 = vld [vmem:[#allocation3] sm:$0x3]
        %v631 = vmul.f32 %v629, 0.9
        %v632 = vmul.f32 %v630, 0.1
        %v633 = vadd.f32 %v631, %v632
        %v634 = vmul.f32 %v630, 0.8
        %v635 = vsub.f32 %v633, 1.0
        %vm636 = vcmp.gt.f32.partialorder %v635, 0.0
        %v637 = vsel %vm636, 1.0, 0.0
        %v638 = vsub.f32 1.0, %v637
        %v639 = vmul.f32 %v638, %v633
        %640 = vst.msk [vmem:[#allocation2] sm:$0x3] %vm390, %v639
        %v641 = vadd.f32 %v634, %v628
        %642 = vst.msk [vmem:[#allocation3] sm:$0x3] %vm390, %v641
        %v644 = vsel %vm394, %v637, 0
        %646 = vmatpush.msra.mxu0 0.0
        %647 = vmatpush.msra.mxu0 0.0
        %648 = vmatpush.msra.mxu0 0.0
        %649 = vmatpush.msra.mxu0 0.0
        %650 = vmatpush.msra.mxu0 0.0
        %651 = vmatpush.msra.mxu0 0.0
        %652 = vmatpush.msra.mxu0 0.0
        %653 = vmatpush.msra.mxu0 0.0
        %654 = vmatpush.msra.mxu0 0.0
        %655 = vmatpush.msra.mxu0 0.0
        %656 = vmatpush.msra.mxu0 0.0
        %657 = vmatpush.msra.mxu0 0.0
        %658 = vmatpush.msra.mxu0 %v373
        %659 = vmatpush.msra.mxu0 %v372
        %660 = vmatpush.msra.mxu0 %v371
        %661 = vmatpush.msra.mxu0 %v370
        %662 = vmatmul.f32.gmra.mxu0 %v644
        %v663 = vpop.f32.mrf.mxu0
        %v664 = vadd.f32 %v376, %v663
        %665 = vdwg.mxu0
        %v666 = vld [vmem:[#allocation4] sm:$0x3]
        %v667 = vld [vmem:[#allocation5] sm:$0x3]
        %v668 = vld [vmem:[#allocation6] sm:$0x3]
        %v669 = vmul.f32 %v666, 0.9
        %v670 = vmul.f32 %v667, 0.1
        %v671 = vadd.f32 %v669, %v670
        %v672 = vmul.f32 %v667, 0.8
        %v673 = vmul.f32 %v668, 0.99999917
        %v674 = vadd.f32 %v673, 8.3333333e-07
        %v675 = vsub.f32 %v671, %v674
        %vm676 = vcmp.gt.f32.partialorder %v675, 0.0
        %v677 = vsel %vm676, 1.0, 0.0
        %v678 = vsub.f32 1.0, %v677
        %v679 = vmul.f32 %v678, %v671
        %680 = vst.msk [vmem:[#allocation4] sm:$0x3] %vm390, %v679
        %v681 = vadd.f32 %v672, %v664
        %682 = vst.msk [vmem:[#allocation5] sm:$0x3] %vm390, %v681
        %v683 = vmul.f32 %v677, 0.0015
        %v684 = vadd.f32 %v674, %v683
        %685 = vst.msk [vmem:[#allocation6] sm:$0x3] %vm390, %v684
        %v686 = vpack.c.bf16 %v677, %v677
        %s687 = scalar_lea.vmem %s336, 4 [#allocation15]
        %688 = vst.msk [vmem:[%s687] sm:$0x1] %vm439, %v686
        %s689 = scalar_lea.vmem %s294, 10 [#allocation7]
        %v690 = vld [vmem:[%s689] sm:$0x3]
        %v691 = vld [vmem:[#allocation2] sm:$0x3]
        %v692 = vld [vmem:[#allocation3] sm:$0x3]
        %v693 = vmul.f32 %v691, 0.9
        %v694 = vmul.f32 %v692, 0.1
        %v695 = vadd.f32 %v693, %v694
        %v696 = vmul.f32 %v692, 0.8
        %v697 = vsub.f32 %v695, 1.0
        %vm698 = vcmp.gt.f32.partialorder %v697, 0.0
        %v699 = vsel %vm698, 1.0, 0.0
        %v700 = vsub.f32 1.0, %v699
        %v701 = vmul.f32 %v700, %v695
        %702 = vst.msk [vmem:[#allocation2] sm:$0x3] %vm390, %v701
        %v703 = vadd.f32 %v696, %v690
        %704 = vst.msk [vmem:[#allocation3] sm:$0x3] %vm390, %v703
        %v706 = vsel %vm394, %v699, 0
        %708 = vmatpush.msra.mxu0 0.0
        %709 = vmatpush.msra.mxu0 0.0
        %710 = vmatpush.msra.mxu0 0.0
        %711 = vmatpush.msra.mxu0 0.0
        %712 = vmatpush.msra.mxu0 0.0
        %713 = vmatpush.msra.mxu0 0.0
        %714 = vmatpush.msra.mxu0 0.0
        %715 = vmatpush.msra.mxu0 0.0
        %716 = vmatpush.msra.mxu0 0.0
        %717 = vmatpush.msra.mxu0 0.0
        %718 = vmatpush.msra.mxu0 0.0
        %719 = vmatpush.msra.mxu0 0.0
        %720 = vmatpush.msra.mxu0 %v373
        %721 = vmatpush.msra.mxu0 %v372
        %722 = vmatpush.msra.mxu0 %v371
        %723 = vmatpush.msra.mxu0 %v370
        %724 = vmatmul.f32.gmra.mxu0 %v706
        %v725 = vpop.f32.mrf.mxu0
        %v726 = vadd.f32 %v376, %v725
        %727 = vdwg.mxu0
        %v728 = vld [vmem:[#allocation4] sm:$0x3]
        %v729 = vld [vmem:[#allocation5] sm:$0x3]
        %v730 = vld [vmem:[#allocation6] sm:$0x3]
        %v731 = vmul.f32 %v728, 0.9
        %v732 = vmul.f32 %v729, 0.1
        %v733 = vadd.f32 %v731, %v732
        %v734 = vmul.f32 %v729, 0.8
        %v735 = vmul.f32 %v730, 0.99999917
        %v736 = vadd.f32 %v735, 8.3333333e-07
        %v737 = vsub.f32 %v733, %v736
        %vm738 = vcmp.gt.f32.partialorder %v737, 0.0
        %v739 = vsel %vm738, 1.0, 0.0
        %v740 = vsub.f32 1.0, %v739
        %v741 = vmul.f32 %v740, %v733
        %742 = vst.msk [vmem:[#allocation4] sm:$0x3] %vm390, %v741
        %v743 = vadd.f32 %v734, %v726
        %744 = vst.msk [vmem:[#allocation5] sm:$0x3] %vm390, %v743
        %v745 = vmul.f32 %v739, 0.0015
        %v746 = vadd.f32 %v736, %v745
        %747 = vst.msk [vmem:[#allocation6] sm:$0x3] %vm390, %v746
        %v748 = vpack.c.bf16 %v739, %v739
        %s749 = scalar_lea.vmem %s336, 5 [#allocation15]
        %750 = vst.msk [vmem:[%s749] sm:$0x1] %vm439, %v748
        %s751 = scalar_lea.vmem %s294, 12 [#allocation7]
        %v752 = vld [vmem:[%s751] sm:$0x3]
        %v753 = vld [vmem:[#allocation2] sm:$0x3]
        %v754 = vld [vmem:[#allocation3] sm:$0x3]
        %v755 = vmul.f32 %v753, 0.9
        %v756 = vmul.f32 %v754, 0.1
        %v757 = vadd.f32 %v755, %v756
        %v758 = vmul.f32 %v754, 0.8
        %v759 = vsub.f32 %v757, 1.0
        %vm760 = vcmp.gt.f32.partialorder %v759, 0.0
        %v761 = vsel %vm760, 1.0, 0.0
        %v762 = vsub.f32 1.0, %v761
        %v763 = vmul.f32 %v762, %v757
        %764 = vst.msk [vmem:[#allocation2] sm:$0x3] %vm390, %v763
        %v765 = vadd.f32 %v758, %v752
        %766 = vst.msk [vmem:[#allocation3] sm:$0x3] %vm390, %v765
        %v768 = vsel %vm394, %v761, 0
        %770 = vmatpush.msra.mxu0 0.0
        %771 = vmatpush.msra.mxu0 0.0
        %772 = vmatpush.msra.mxu0 0.0
        %773 = vmatpush.msra.mxu0 0.0
        %774 = vmatpush.msra.mxu0 0.0
        %775 = vmatpush.msra.mxu0 0.0
        %776 = vmatpush.msra.mxu0 0.0
        %777 = vmatpush.msra.mxu0 0.0
        %778 = vmatpush.msra.mxu0 0.0
        %779 = vmatpush.msra.mxu0 0.0
        %780 = vmatpush.msra.mxu0 0.0
        %781 = vmatpush.msra.mxu0 0.0
        %782 = vmatpush.msra.mxu0 %v373
        %783 = vmatpush.msra.mxu0 %v372
        %784 = vmatpush.msra.mxu0 %v371
        %785 = vmatpush.msra.mxu0 %v370
        %786 = vmatmul.f32.gmra.mxu0 %v768
        %v787 = vpop.f32.mrf.mxu0
        %v788 = vadd.f32 %v376, %v787
        %789 = vdwg.mxu0
        %v790 = vld [vmem:[#allocation4] sm:$0x3]
        %v791 = vld [vmem:[#allocation5] sm:$0x3]
        %v792 = vld [vmem:[#allocation6] sm:$0x3]
        %v793 = vmul.f32 %v790, 0.9
        %v794 = vmul.f32 %v791, 0.1
        %v795 = vadd.f32 %v793, %v794
        %v796 = vmul.f32 %v791, 0.8
        %v797 = vmul.f32 %v792, 0.99999917
        %v798 = vadd.f32 %v797, 8.3333333e-07
        %v799 = vsub.f32 %v795, %v798
        %vm800 = vcmp.gt.f32.partialorder %v799, 0.0
        %v801 = vsel %vm800, 1.0, 0.0
        %v802 = vsub.f32 1.0, %v801
        %v803 = vmul.f32 %v802, %v795
        %804 = vst.msk [vmem:[#allocation4] sm:$0x3] %vm390, %v803
        %v805 = vadd.f32 %v796, %v788
        %806 = vst.msk [vmem:[#allocation5] sm:$0x3] %vm390, %v805
        %v807 = vmul.f32 %v801, 0.0015
        %v808 = vadd.f32 %v798, %v807
        %809 = vst.msk [vmem:[#allocation6] sm:$0x3] %vm390, %v808
        %v810 = vpack.c.bf16 %v801, %v801
        %s811 = scalar_lea.vmem %s336, 6 [#allocation15]
        %812 = vst.msk [vmem:[%s811] sm:$0x1] %vm439, %v810
        %s813 = scalar_lea.vmem %s294, 14 [#allocation7]
        %v814 = vld [vmem:[%s813] sm:$0x3]
        %v815 = vld [vmem:[#allocation2] sm:$0x3]
        %v816 = vld [vmem:[#allocation3] sm:$0x3]
        %v817 = vmul.f32 %v815, 0.9
        %v818 = vmul.f32 %v816, 0.1
        %v819 = vadd.f32 %v817, %v818
        %v820 = vmul.f32 %v816, 0.8
        %v821 = vsub.f32 %v819, 1.0
        %vm822 = vcmp.gt.f32.partialorder %v821, 0.0
        %v823 = vsel %vm822, 1.0, 0.0
        %v824 = vsub.f32 1.0, %v823
        %v825 = vmul.f32 %v824, %v819
        %826 = vst.msk [vmem:[#allocation2] sm:$0x3] %vm390, %v825
        %v827 = vadd.f32 %v820, %v814
        %828 = vst.msk [vmem:[#allocation3] sm:$0x3] %vm390, %v827
        %v830 = vsel %vm394, %v823, 0
        %832 = vmatpush.msra.mxu0 0.0
        %833 = vmatpush.msra.mxu0 0.0
        %834 = vmatpush.msra.mxu0 0.0
        %835 = vmatpush.msra.mxu0 0.0
        %836 = vmatpush.msra.mxu0 0.0
        %837 = vmatpush.msra.mxu0 0.0
        %838 = vmatpush.msra.mxu0 0.0
        %839 = vmatpush.msra.mxu0 0.0
        %840 = vmatpush.msra.mxu0 0.0
        %841 = vmatpush.msra.mxu0 0.0
        %842 = vmatpush.msra.mxu0 0.0
        %843 = vmatpush.msra.mxu0 0.0
        %844 = vmatpush.msra.mxu0 %v373
        %845 = vmatpush.msra.mxu0 %v372
        %846 = vmatpush.msra.mxu0 %v371
        %847 = vmatpush.msra.mxu0 %v370
        %848 = vmatmul.f32.gmra.mxu0 %v830
        %v849 = vpop.f32.mrf.mxu0
        %v850 = vadd.f32 %v376, %v849
        %851 = vdwg.mxu0
        %v852 = vld [vmem:[#allocation4] sm:$0x3]
        %v853 = vld [vmem:[#allocation5] sm:$0x3]
        %v854 = vld [vmem:[#allocation6] sm:$0x3]
        %v855 = vmul.f32 %v852, 0.9
        %v856 = vmul.f32 %v853, 0.1
        %v857 = vadd.f32 %v855, %v856
        %v858 = vmul.f32 %v853, 0.8
        %v859 = vmul.f32 %v854, 0.99999917
        %v860 = vadd.f32 %v859, 8.3333333e-07
        %v861 = vsub.f32 %v857, %v860
        %vm862 = vcmp.gt.f32.partialorder %v861, 0.0
        %v863 = vsel %vm862, 1.0, 0.0
        %v864 = vsub.f32 1.0, %v863
        %v865 = vmul.f32 %v864, %v857
        %866 = vst.msk [vmem:[#allocation4] sm:$0x3] %vm390, %v865
        %v867 = vadd.f32 %v858, %v850
        %868 = vst.msk [vmem:[#allocation5] sm:$0x3] %vm390, %v867
        %v869 = vmul.f32 %v863, 0.0015
        %v870 = vadd.f32 %v860, %v869
        %871 = vst.msk [vmem:[#allocation6] sm:$0x3] %vm390, %v870
        %v872 = vpack.c.bf16 %v863, %v863
        %s873 = scalar_lea.vmem %s336, 7 [#allocation15]
        %874 = vst.msk [vmem:[%s873] sm:$0x1] %vm439, %v872
        %p875 = scmp.eq.s32.totalorder %s28, 1
        // Predicated region
        $region61: #{tpu_custom_call.1} parent=39 // pred_check
          %p876 = pneg %p875
        $region62: #{tpu_custom_call.1} parent=39 // pred_check_branch
          %878 = sbr.rel (%p876) target = $region64
        $region63: #{tpu_custom_call.1} parent=39 // pred_region
          %879 = vst.msk [vmem:[#allocation16] sm:$0x3] %vm390, %v823
          %v880 = vld [vmem:[#allocation2] sm:$0x3]
          %882 = vrot.lane.b32.xlu0 %v880, 32
          %v883 = vpop.permute.xlu0 %882
          %vm885 = vcmask 517376
          %886 = vst.msk [vmem:[#allocation16] sm:$0x3] %vm885, %v883
          %v887 = vld [vmem:[#allocation3] sm:$0x3]
          %889 = vrot.lane.b32.xlu0 %v887, 64
          %v890 = vpop.permute.xlu0 %889
          %vm892 = vcmask 779776
          %893 = vst.msk [vmem:[#allocation16] sm:$0x3] %vm892, %v890
          %894 = vst.msk [vmem:[#allocation18] sm:$0x3] %vm390, %v863
          %v895 = vld [vmem:[#allocation4] sm:$0x3]
          %897 = vrot.lane.b32.xlu0 %v895, 32
          %v898 = vpop.permute.xlu0 %897
          %900 = vst.msk [vmem:[#allocation18] sm:$0x3] %vm885, %v898
          %v901 = vld [vmem:[#allocation5] sm:$0x3]
          %903 = vrot.lane.b32.xlu0 %v901, 64
          %v904 = vpop.permute.xlu0 %903
          %906 = vst.msk [vmem:[#allocation18] sm:$0x3] %vm892, %v904
          %v907 = vld [vmem:[#allocation6] sm:$0x3]
          %909 = vrot.lane.b32.xlu0 %v907, 96
          %v910 = vpop.permute.xlu0 %909
          %vm912 = vcmask 1042176
          %913 = vst.msk [vmem:[#allocation18] sm:$0x3] %vm912, %v910
        $region64: #{tpu_custom_call.1} parent=39 // pred_fallthru
          _
        %s914 = sand.u32 %s146, 1
        %s915 = scalar_lea.sflag [#allocation9], %s914
        %s916 = sand.u32 %s146, 1
        %s917 = smul.addr %s916, 8
        %s918 = scalar_lea.vmem [#allocation15], %s917
        // Predicated region
        $region65: #{tpu_custom_call.1} parent=39 // pred_check
          %p919 = pneg %p156
        $region66: #{tpu_custom_call.1} parent=39 // pred_check_branch
          %921 = sbr.rel (%p919) target = $region68
        $region67: #{tpu_custom_call.1} parent=39 // pred_region
          %s922 = smul.u32 8, %s28
          %924 = vsyncadd %s915, 0
          %s925 = scalar_lea.hbm %s5, %s922
          %s926 = sshll.u32 %s918, 4
          %s927 = int_to_ptr.vmem [resolvable:$true] %s926
          %s928 = sshll.u32 %s925, 4
          %s929 = int_to_ptr.hbm [resolvable:$true] %s928
          %934 = dma.vmem_to_hbm [thread:$0]  %s927, 128, %s929, %s915, 16, 16, 1
        $region68: #{tpu_custom_call.1} parent=39 // pred_fallthru
          _
        // Predicated region
        $region69: #{tpu_custom_call.1} parent=39 // pred_check
          %p935 = pneg %p177
        $region70: #{tpu_custom_call.1} parent=39 // pred_check_branch
          %937 = sbr.rel (%p935) target = $region72
        $region71: #{tpu_custom_call.1} parent=39 // pred_region
          %939 = vsyncadd [#allocation17], 0
          %s941 = sshll.u32 [#allocation16], 4
          %s942 = int_to_ptr.vmem [resolvable:$true] %s941
          %s943 = sshll.u32 %s6, 4
          %s944 = int_to_ptr.hbm [resolvable:$true] %s943
          %946 = dma.vmem_to_hbm [thread:$0]  %s942, 32, %s944, [#allocation17]
        $region72: #{tpu_custom_call.1} parent=39 // pred_fallthru
          _
        // Predicated region
        $region73: #{tpu_custom_call.1} parent=39 // pred_check
          %p947 = pneg %p198
        $region74: #{tpu_custom_call.1} parent=39 // pred_check_branch
          %949 = sbr.rel (%p947) target = $region76
        $region75: #{tpu_custom_call.1} parent=39 // pred_region
          %951 = vsyncadd [#allocation17], 0
          %s953 = sshll.u32 [#allocation18], 4
          %s954 = int_to_ptr.vmem [resolvable:$true] %s953
          %s955 = sshll.u32 %s7, 4
          %s956 = int_to_ptr.hbm [resolvable:$true] %s955
          %958 = dma.vmem_to_hbm [thread:$0]  %s954, 32, %s956, [#allocation17]
        $region76: #{tpu_custom_call.1} parent=39 // pred_fallthru
          _
        // Predicated region
        $region77: #{tpu_custom_call.1} parent=39 // pred_check
          %p959 = pneg %p177
        $region78: #{tpu_custom_call.1} parent=39 // pred_check_branch
          %961 = sbr.rel (%p959) target = $region80
        $region79: #{tpu_custom_call.1} parent=39 // pred_region
          %963 = dma.done [#allocation17], 32
        $region80: #{tpu_custom_call.1} parent=39 // pred_fallthru
          _
        // Predicated region
        $region81: #{tpu_custom_call.1} parent=39 // pred_check
          %p964 = pneg %p198
        $region82: #{tpu_custom_call.1} parent=39 // pred_check_branch
          %966 = sbr.rel (%p964) target = $region84
        $region83: #{tpu_custom_call.1} parent=39 // pred_region
          %968 = dma.done [#allocation17], 32
        $region84: #{tpu_custom_call.1} parent=39 // pred_fallthru
          _
      $region40: #{tpu_custom_call.1} parent=5 // pred_fallthru
        _
      %p969 = scmp.le.s32.totalorder 2, %s23
      // Predicated region
      $region85: #{tpu_custom_call.1} parent=5 // pred_check
        %p970 = pneg %p969
      $region86: #{tpu_custom_call.1} parent=5 // pred_check_branch
        %972 = sbr.rel (%p970) target = $region88
      $region87: #{tpu_custom_call.1} parent=5 // pred_region
        %s973 = ssub.s32 %s23, 2
        // Predicated region
        $region89: #{tpu_custom_call.1} parent=87 // pred_check
          %p974 = pneg %p162
        $region90: #{tpu_custom_call.1} parent=87 // pred_check_branch
          %976 = sbr.rel (%p974) target = $region92
        $region91: #{tpu_custom_call.1} parent=87 // pred_region
          %s977 = sand.u32 %s147, 1
          %s978 = scalar_lea.sflag [#allocation9], %s977
          %s979 = sand.u32 %s147, 1
          %s980 = smul.addr %s979, 8
          %s981 = scalar_lea.vmem [#allocation15], %s980
          %983 = dma.done %s978, 128
        $region92: #{tpu_custom_call.1} parent=87 // pred_fallthru
          _
      $region88: #{tpu_custom_call.1} parent=5 // pred_fallthru
        _
    $region6: #{tpu_custom_call.1} parent=1 // loop_footer
      %s27 = sadd.s32 1, %s23
    $region7: #{tpu_custom_call.1} parent=1 // loop_footer_branch
      %22 = sbr.rel target = $region3
    $region8: #{tpu_custom_call.1} parent=1 // loop_exit
      _
    %984 = vsyncpa [#allocation8], 1
    %s985 = scalar_lea.sflag [#allocation8], 1
    %986 = vsyncpa %s985, 1
    %987 = vsyncpa [#allocation11], 1
    %988 = vsyncpa [#allocation14], 1
    %989 = vsyncpa [#allocation9], 1
    %s990 = scalar_lea.sflag [#allocation9], 1
    %991 = vsyncpa %s990, 1
    %992 = vsyncpa [#allocation17], 1

</llo_original>
